<compile_context>
chip_gen: v7x
topology: tpu7x:2x2x1
jax: 0.10.0
libtpu: 0.0.40
codegen_flags: <defaults>
</compile_context>

<pallas_src>
import functools

import jax
import jax.numpy as jnp
from jax.experimental import pallas as pl
from jax.experimental.pallas import tpu as pltpu


_LANE = 128
_SUBLANE = 8


def _round_up(x, m):
    return (x + m - 1) // m * m


# ---------------------------------------------------------------------------
# Fused decode-step kernel: embedding gather + L LSTM layers + fc projection.
# ---------------------------------------------------------------------------
def _decoder_step_kernel(n_layers, tok_ref, emb_ref, h_in_ref, c_in_ref, *rest):
    layer_refs = rest[:3 * n_layers]                 # [wih_t, whh_t, bias] * L
    wfc_ref = rest[3 * n_layers]
    bfc_ref = rest[3 * n_layers + 1]
    logits_ref = rest[3 * n_layers + 2]
    h_out_ref = rest[3 * n_layers + 3]
    c_out_ref = rest[3 * n_layers + 4]
    x_scratch = rest[3 * n_layers + 5]

    b_pad = h_in_ref.shape[1]
    hp = h_in_ref.shape[2]                           # padded hidden width (mult of 128)

    # Embedding gather: token ids live in SMEM; table rows are pulled with a
    # dynamic sublane slice.  nn.Dropout is identity in eval mode.
    # TODO(synk): training-mode dropout not implemented.
    for b in range(b_pad):
        tok = tok_ref[b]
        x_scratch[pl.ds(b, 1), :] = emb_ref[pl.ds(tok, 1), :]

    x = x_scratch[...]                               # (B_pad, E) f32

    for l in range(n_layers):
        wih_t = layer_refs[3 * l][...]               # (Din,   4*Hp) bf16
        whh_t = layer_refs[3 * l + 1][...]           # (Hp,    4*Hp) bf16
        bias = layer_refs[3 * l + 2][...]            # (1,     4*Hp) f32 (b_ih+b_hh)

        h_prev = h_in_ref[l]                         # (B_pad, Hp) f32
        c_prev = c_in_ref[l]

        gates = (jnp.dot(x.astype(jnp.bfloat16), wih_t,
                         preferred_element_type=jnp.float32)
                 + jnp.dot(h_prev.astype(jnp.bfloat16), whh_t,
                           preferred_element_type=jnp.float32)
                 + bias)                             # (B_pad, 4*Hp) f32

        # Hp is a multiple of 128, so each gate slice is lane-tile aligned.
        # Gate order (PyTorch): i, f, g, o.
        i_g = jax.nn.sigmoid(gates[:, 0 * hp:1 * hp])
        f_g = jax.nn.sigmoid(gates[:, 1 * hp:2 * hp])
        g_g = jnp.tanh(gates[:, 2 * hp:3 * hp])
        o_g = jax.nn.sigmoid(gates[:, 3 * hp:4 * hp])

        c_new = f_g * c_prev + i_g * g_g
        h_new = o_g * jnp.tanh(c_new)

        h_out_ref[l] = h_new                         # in-place (aliased) state update
        c_out_ref[l] = c_new
        x = h_new                                    # feeds next layer

    logits_ref[...] = (jnp.dot(x.astype(jnp.bfloat16), wfc_ref[...],
                               preferred_element_type=jnp.float32)
                       + bfc_ref[...])               # (B_pad, V_pad) f32, lane-dense


_VMEM = pl.BlockSpec(memory_space=pltpu.MemorySpace.VMEM)
_SMEM = pl.BlockSpec(memory_space=pltpu.MemorySpace.SMEM)


# ---------------------------------------------------------------------------
# One-time weight preparation (hoisted out of the per-token forward path).
# ---------------------------------------------------------------------------
def prepare_decoder_params(params):
    emb = params["embedding"].astype(jnp.float32)          # (V, E)
    V, _E = emb.shape
    n_layers = len(params["w_ih"])
    H = params["w_hh"][0].shape[1]
    H_pad = _round_up(H, _LANE)
    V_pad = _round_up(V, _LANE)

    w_ih_t, w_hh_t, b_g = [], [], []
    for l in range(n_layers):
        w_ih = params["w_ih"][l]                           # (4H, Din)  gates i,f,g,o
        w_hh = params["w_hh"][l]                           # (4H, H)
        din = w_ih.shape[1]
        din_pad = din if l == 0 else H_pad                 # layer 0 input = embedding

        wi = jnp.transpose(w_ih.reshape(4, H, din), (2, 0, 1))   # (Din, 4, H)
        wi = jnp.pad(wi, ((0, din_pad - din), (0, 0), (0, H_pad - H)))
        w_ih_t.append(wi.reshape(din_pad, 4 * H_pad).astype(jnp.bfloat16))

        wh = jnp.transpose(w_hh.reshape(4, H, H), (2, 0, 1))     # (H, 4, H)
        wh = jnp.pad(wh, ((0, H_pad - H), (0, 0), (0, H_pad - H)))
        w_hh_t.append(wh.reshape(H_pad, 4 * H_pad).astype(jnp.bfloat16))

        b = (params["b_ih"][l] + params["b_hh"][l]).reshape(4, H)
        b = jnp.pad(b, ((0, 0), (0, H_pad - H)))
        b_g.append(b.reshape(1, 4 * H_pad).astype(jnp.float32))

    wfc = jnp.pad(params["w_fc"].T, ((0, H_pad - H), (0, V_pad - V)))
    bfc = jnp.pad(params["b_fc"], (0, V_pad - V)).reshape(1, V_pad)

    return {
        "embedding": emb,                     # (V, E) f32 (gather source)
        "w_ih_t": w_ih_t,                     # list[(Din_pad, 4*H_pad)] bf16
        "w_hh_t": w_hh_t,                     # list[(H_pad,   4*H_pad)] bf16
        "b_g": b_g,                           # list[(1, 4*H_pad)] f32
        "w_fc_t": wfc.astype(jnp.bfloat16),   # (H_pad, V_pad) bf16
        "b_fc": bfc.astype(jnp.float32),      # (1, V_pad) f32
    }


# ---------------------------------------------------------------------------
# Decoder forward (single fused pallas_call, jitted as a whole).
# ---------------------------------------------------------------------------
@jax.jit
def decoder_forward(prepared, token_ids, hidden, cell):
    """Mirrors Decoder.forward(input, hidden, cell) in eval mode.

    token_ids : (B,) int32 ; hidden, cell : (L, B, H) f32.
    Returns (prediction (B, V), hidden (L, B, H), cell (L, B, H)).
    """
    n_layers, B, H = hidden.shape
    V, E = prepared["embedding"].shape
    H_pad = prepared["w_hh_t"][0].shape[0]
    V_pad = prepared["w_fc_t"].shape[1]
    B_pad = _round_up(B, _SUBLANE)

    tok_pad = jnp.zeros((B_pad,), jnp.int32).at[:B].set(token_ids.astype(jnp.int32))
    h_pad = jnp.zeros((n_layers, B_pad, H_pad), jnp.float32).at[:, :B, :H].set(hidden)
    c_pad = jnp.zeros((n_layers, B_pad, H_pad), jnp.float32).at[:, :B, :H].set(cell)

    flat_layers = []
    for l in range(n_layers):
        flat_layers += [prepared["w_ih_t"][l], prepared["w_hh_t"][l], prepared["b_g"][l]]

    operands = [tok_pad, prepared["embedding"], h_pad, c_pad,
                *flat_layers, prepared["w_fc_t"], prepared["b_fc"]]
    in_specs = [_SMEM] + [_VMEM] * (len(operands) - 1)

    logits_pad, h_new_pad, c_new_pad = pl.pallas_call(
        functools.partial(_decoder_step_kernel, n_layers),
        out_shape=(jax.ShapeDtypeStruct((B_pad, V_pad), jnp.float32),
                   jax.ShapeDtypeStruct((n_layers, B_pad, H_pad), jnp.float32),
                   jax.ShapeDtypeStruct((n_layers, B_pad, H_pad), jnp.float32)),
        in_specs=in_specs,
        out_specs=(_VMEM, _VMEM, _VMEM),
        scratch_shapes=[pltpu.VMEM((B_pad, E), jnp.float32)],
        # hidden/cell updated in place (operand 2 -> output 1, operand 3 -> output 2)
        input_output_aliases={2: 1, 3: 2},
    )(*operands)

    return (logits_pad[:B, :V],
            h_new_pad[:, :B, :H],
            c_new_pad[:, :B, :H])


# ---------------------------------------------------------------------------
# Pure-JAX reference (f32 weights) for a correctness spot check.
# ---------------------------------------------------------------------------
def _decoder_ref(params, token_ids, hidden, cell):
    n_layers, _, H = hidden.shape
    x = jnp.take(params["embedding"], token_ids, axis=0)
    new_h, new_c = [], []
    for l in range(n_layers):
        gates = (x @ params["w_ih"][l].T + hidden[l] @ params["w_hh"][l].T
                 + params["b_ih"][l] + params["b_hh"][l])
        i = jax.nn.sigmoid(gates[:, 0 * H:1 * H])
        f = jax.nn.sigmoid(gates[:, 1 * H:2 * H])
        g = jnp.tanh(gates[:, 2 * H:3 * H])
        o = jax.nn.sigmoid(gates[:, 3 * H:4 * H])
        c_n = f * cell[l] + i * g
        h_n = o * jnp.tanh(c_n)
        new_h.append(h_n)
        new_c.append(c_n)
        x = h_n
    pred = x @ params["w_fc"].T + params["b_fc"]
    return pred, jnp.stack(new_h), jnp.stack(new_c)


# ---------------------------------------------------------------------------
# Deterministic parameter init (mimics module __init__ shapes, PyTorch layout).
# ---------------------------------------------------------------------------
def init_params(key, output_dim, emb_dim, hid_dim, n_layers):
    keys = jax.random.split(key, 3 + 4 * n_layers)
    k_it = iter(keys)
    scale = 0.1
    params = {
        "embedding": jax.random.normal(next(k_it), (output_dim, emb_dim),
                                       jnp.float32) * scale,
        "w_ih": [], "w_hh": [], "b_ih": [], "b_hh": [],
    }
    for l in range(n_layers):
        din = emb_dim if l == 0 else hid_dim
        params["w_ih"].append(
            jax.random.normal(next(k_it), (4 * hid_dim, din), jnp.float32) * scale)
        params["w_hh"].append(
            jax.random.normal(next(k_it), (4 * hid_dim, hid_dim), jnp.float32) * scale)
        params["b_ih"].append(
            jax.random.normal(next(k_it), (4 * hid_dim,), jnp.float32) * scale)
        params["b_hh"].append(
            jax.random.normal(next(k_it), (4 * hid_dim,), jnp.float32) * scale)
    params["w_fc"] = jax.random.normal(next(k_it), (output_dim, hid_dim),
                                       jnp.float32) * scale
    params["b_fc"] = jax.random.normal(next(k_it), (output_dim,),
                                       jnp.float32) * scale
    return params


if __name__ == "__main__":
    # Small shapes consistent with the module's forward.
    B = 2            # batch
    OUTPUT_DIM = 50  # vocab size
    EMB_DIM = 16
    HID_DIM = 32
    N_LAYERS = 2

    key = jax.random.PRNGKey(0)
    k_p, k_tok, k_h, k_c = jax.random.split(key, 4)

    params = init_params(k_p, OUTPUT_DIM, EMB_DIM, HID_DIM, N_LAYERS)
    prepared = prepare_decoder_params(params)     # one-time weight prep (hoisted)

    token_ids = jax.random.randint(k_tok, (B,), 0, OUTPUT_DIM, dtype=jnp.int32)
    hidden = jax.random.normal(k_h, (N_LAYERS, B, HID_DIM), jnp.float32)
    cell = jax.random.normal(k_c, (N_LAYERS, B, HID_DIM), jnp.float32)

    pred, h_new, c_new = decoder_forward(prepared, token_ids, hidden, cell)
    jax.block_until_ready((pred, h_new, c_new))

    # Spot-check against the pure-JAX f32 reference (weights are bf16 in the
    # kernel, so use a correspondingly loose tolerance).
    pred_r, h_r, c_r = _decoder_ref(params, token_ids, hidden, cell)
    assert pred.shape == (B, OUTPUT_DIM)
    assert h_new.shape == (N_LAYERS, B, HID_DIM)
    assert c_new.shape == (N_LAYERS, B, HID_DIM)
    assert jnp.allclose(pred, pred_r, atol=2e-2), float(jnp.max(jnp.abs(pred - pred_r)))
    assert jnp.allclose(h_new, h_r, atol=2e-2), float(jnp.max(jnp.abs(h_new - h_r)))
    assert jnp.allclose(c_new, c_r, atol=2e-2), float(jnp.max(jnp.abs(c_new - c_r)))

    print("KERNEL_OK")
</pallas_src>

<mosaic_0001>
module attributes {stable_mosaic.version = 11 : i64} {
  func.func @_decoder_step_kernel(%arg0: memref<8xi32, #tpu.memory_space<smem>>, %arg1: memref<50x16xf32, #tpu.memory_space<vmem>>, %arg2: memref<2x8x128xf32, #tpu.memory_space<vmem>>, %arg3: memref<2x8x128xf32, #tpu.memory_space<vmem>>, %arg4: memref<16x512xbf16, #tpu.memory_space<vmem>>, %arg5: memref<128x512xbf16, #tpu.memory_space<vmem>>, %arg6: memref<1x512xf32, #tpu.memory_space<vmem>>, %arg7: memref<128x512xbf16, #tpu.memory_space<vmem>>, %arg8: memref<128x512xbf16, #tpu.memory_space<vmem>>, %arg9: memref<1x512xf32, #tpu.memory_space<vmem>>, %arg10: memref<128x128xbf16, #tpu.memory_space<vmem>>, %arg11: memref<1x128xf32, #tpu.memory_space<vmem>>, %arg12: memref<8x128xf32, #tpu.memory_space<vmem>>, %arg13: memref<2x8x128xf32, #tpu.memory_space<vmem>>, %arg14: memref<2x8x128xf32, #tpu.memory_space<vmem>>, %arg15: memref<8x16xf32, #tpu.memory_space<vmem>>) attributes {dimension_semantics = [], scalar_prefetch = 0 : i64, scratch_operands = 1 : i64, tpu.core_type = #tpu.core_type<tc>} {
    %c0 = arith.constant 0 : index
    %0 = memref.load %arg0[%c0] : memref<8xi32, #tpu.memory_space<smem>>
    %1 = arith.index_cast %0 : i32 to index
    %c0_0 = arith.constant 0 : index
    %2 = vector.load %arg1[%1, %c0_0] : memref<50x16xf32, #tpu.memory_space<vmem>>, vector<1x16xf32>
    %c0_1 = arith.constant 0 : index
    %c0_2 = arith.constant 0 : index
    %3 = vector.load %arg15[%c0_1, %c0_2] : memref<8x16xf32, #tpu.memory_space<vmem>>, vector<1x16xf32>
    tpu.vector_store %arg15[%c0_1, %c0_2], %2 {strides = array<i32>} : memref<8x16xf32, #tpu.memory_space<vmem>>, vector<1x16xf32>,
    %c1 = arith.constant 1 : index
    %4 = memref.load %arg0[%c1] : memref<8xi32, #tpu.memory_space<smem>>
    %5 = arith.index_cast %4 : i32 to index
    %c0_3 = arith.constant 0 : index
    %6 = vector.load %arg1[%5, %c0_3] : memref<50x16xf32, #tpu.memory_space<vmem>>, vector<1x16xf32>
    %c1_4 = arith.constant 1 : index
    %c0_5 = arith.constant 0 : index
    %7 = vector.load %arg15[%c1_4, %c0_5] : memref<8x16xf32, #tpu.memory_space<vmem>>, vector<1x16xf32>
    tpu.vector_store %arg15[%c1_4, %c0_5], %6 {strides = array<i32>} : memref<8x16xf32, #tpu.memory_space<vmem>>, vector<1x16xf32>,
    %c2 = arith.constant 2 : index
    %8 = memref.load %arg0[%c2] : memref<8xi32, #tpu.memory_space<smem>>
    %9 = arith.index_cast %8 : i32 to index
    %c0_6 = arith.constant 0 : index
    %10 = vector.load %arg1[%9, %c0_6] : memref<50x16xf32, #tpu.memory_space<vmem>>, vector<1x16xf32>
    %c2_7 = arith.constant 2 : index
    %c0_8 = arith.constant 0 : index
    %11 = vector.load %arg15[%c2_7, %c0_8] : memref<8x16xf32, #tpu.memory_space<vmem>>, vector<1x16xf32>
    tpu.vector_store %arg15[%c2_7, %c0_8], %10 {strides = array<i32>} : memref<8x16xf32, #tpu.memory_space<vmem>>, vector<1x16xf32>,
    %c3 = arith.constant 3 : index
    %12 = memref.load %arg0[%c3] : memref<8xi32, #tpu.memory_space<smem>>
    %13 = arith.index_cast %12 : i32 to index
    %c0_9 = arith.constant 0 : index
    %14 = vector.load %arg1[%13, %c0_9] : memref<50x16xf32, #tpu.memory_space<vmem>>, vector<1x16xf32>
    %c3_10 = arith.constant 3 : index
    %c0_11 = arith.constant 0 : index
    %15 = vector.load %arg15[%c3_10, %c0_11] : memref<8x16xf32, #tpu.memory_space<vmem>>, vector<1x16xf32>
    tpu.vector_store %arg15[%c3_10, %c0_11], %14 {strides = array<i32>} : memref<8x16xf32, #tpu.memory_space<vmem>>, vector<1x16xf32>,
    %c4 = arith.constant 4 : index
    %16 = memref.load %arg0[%c4] : memref<8xi32, #tpu.memory_space<smem>>
    %17 = arith.index_cast %16 : i32 to index
    %c0_12 = arith.constant 0 : index
    %18 = vector.load %arg1[%17, %c0_12] : memref<50x16xf32, #tpu.memory_space<vmem>>, vector<1x16xf32>
    %c4_13 = arith.constant 4 : index
    %c0_14 = arith.constant 0 : index
    %19 = vector.load %arg15[%c4_13, %c0_14] : memref<8x16xf32, #tpu.memory_space<vmem>>, vector<1x16xf32>
    tpu.vector_store %arg15[%c4_13, %c0_14], %18 {strides = array<i32>} : memref<8x16xf32, #tpu.memory_space<vmem>>, vector<1x16xf32>,
    %c5 = arith.constant 5 : index
    %20 = memref.load %arg0[%c5] : memref<8xi32, #tpu.memory_space<smem>>
    %21 = arith.index_cast %20 : i32 to index
    %c0_15 = arith.constant 0 : index
    %22 = vector.load %arg1[%21, %c0_15] : memref<50x16xf32, #tpu.memory_space<vmem>>, vector<1x16xf32>
    %c5_16 = arith.constant 5 : index
    %c0_17 = arith.constant 0 : index
    %23 = vector.load %arg15[%c5_16, %c0_17] : memref<8x16xf32, #tpu.memory_space<vmem>>, vector<1x16xf32>
    tpu.vector_store %arg15[%c5_16, %c0_17], %22 {strides = array<i32>} : memref<8x16xf32, #tpu.memory_space<vmem>>, vector<1x16xf32>,
    %c6 = arith.constant 6 : index
    %24 = memref.load %arg0[%c6] : memref<8xi32, #tpu.memory_space<smem>>
    %25 = arith.index_cast %24 : i32 to index
    %c0_18 = arith.constant 0 : index
    %26 = vector.load %arg1[%25, %c0_18] : memref<50x16xf32, #tpu.memory_space<vmem>>, vector<1x16xf32>
    %c6_19 = arith.constant 6 : index
    %c0_20 = arith.constant 0 : index
    %27 = vector.load %arg15[%c6_19, %c0_20] : memref<8x16xf32, #tpu.memory_space<vmem>>, vector<1x16xf32>
    tpu.vector_store %arg15[%c6_19, %c0_20], %26 {strides = array<i32>} : memref<8x16xf32, #tpu.memory_space<vmem>>, vector<1x16xf32>,
    %c7 = arith.constant 7 : index
    %28 = memref.load %arg0[%c7] : memref<8xi32, #tpu.memory_space<smem>>
    %29 = arith.index_cast %28 : i32 to index
    %c0_21 = arith.constant 0 : index
    %30 = vector.load %arg1[%29, %c0_21] : memref<50x16xf32, #tpu.memory_space<vmem>>, vector<1x16xf32>
    %c7_22 = arith.constant 7 : index
    %c0_23 = arith.constant 0 : index
    %31 = vector.load %arg15[%c7_22, %c0_23] : memref<8x16xf32, #tpu.memory_space<vmem>>, vector<1x16xf32>
    tpu.vector_store %arg15[%c7_22, %c0_23], %30 {strides = array<i32>} : memref<8x16xf32, #tpu.memory_space<vmem>>, vector<1x16xf32>,
    %c0_24 = arith.constant 0 : index
    %c0_25 = arith.constant 0 : index
    %32 = vector.load %arg15[%c0_24, %c0_25] : memref<8x16xf32, #tpu.memory_space<vmem>>, vector<8x16xf32>
    %c0_26 = arith.constant 0 : index
    %c0_27 = arith.constant 0 : index
    %33 = vector.load %arg4[%c0_26, %c0_27] : memref<16x512xbf16, #tpu.memory_space<vmem>>, vector<16x512xbf16>
    %c0_28 = arith.constant 0 : index
    %c0_29 = arith.constant 0 : index
    %34 = vector.load %arg5[%c0_28, %c0_29] : memref<128x512xbf16, #tpu.memory_space<vmem>>, vector<128x512xbf16>
    %c0_30 = arith.constant 0 : index
    %c0_31 = arith.constant 0 : index
    %35 = vector.load %arg6[%c0_30, %c0_31] : memref<1x512xf32, #tpu.memory_space<vmem>>, vector<1x512xf32>
    %c0_32 = arith.constant 0 : index
    %c0_33 = arith.constant 0 : index
    %c0_34 = arith.constant 0 : index
    %36 = vector.load %arg2[%c0_32, %c0_33, %c0_34] : memref<2x8x128xf32, #tpu.memory_space<vmem>>, vector<1x8x128xf32>
    %37 = vector.shape_cast %36 : vector<1x8x128xf32> to vector<8x128xf32>
    %c0_35 = arith.constant 0 : index
    %c0_36 = arith.constant 0 : index
    %c0_37 = arith.constant 0 : index
    %38 = vector.load %arg3[%c0_35, %c0_36, %c0_37] : memref<2x8x128xf32, #tpu.memory_space<vmem>>, vector<1x8x128xf32>
    %39 = vector.shape_cast %38 : vector<1x8x128xf32> to vector<8x128xf32>
    %40 = arith.truncf %32 : vector<8x16xf32> to vector<8x16xbf16>
    %cst = arith.constant dense<0.000000e+00> : vector<8x512xf32>
    %41 = tpu.matmul %40, %33, %cst {dimension_numbers = #tpu.dot_dimension_numbers<[1], [0], [0], [1], [0, 0, 1, 1], [], []>} : vector<8x16xbf16>, vector<16x512xbf16>, vector<8x512xf32> -> vector<8x512xf32>
    %42 = arith.truncf %37 : vector<8x128xf32> to vector<8x128xbf16>
    %cst_38 = arith.constant dense<0.000000e+00> : vector<8x512xf32>
    %43 = tpu.matmul %42, %34, %cst_38 {dimension_numbers = #tpu.dot_dimension_numbers<[1], [0], [0], [1], [0, 0, 1, 1], [], []>} : vector<8x128xbf16>, vector<128x512xbf16>, vector<8x512xf32> -> vector<8x512xf32>
    %44 = arith.addf %41, %43 : vector<8x512xf32>
    %45 = vector.broadcast %35 : vector<1x512xf32> to vector<8x512xf32>
    %46 = arith.addf %44, %45 : vector<8x512xf32>
    %47 = vector.extract_strided_slice %46 {offsets = [0, 0], sizes = [8, 128], strides = [1, 1]} : vector<8x512xf32> to vector<8x128xf32>
    %48 = arith.negf %47 : vector<8x128xf32>
    %49 = math.exp %48 : vector<8x128xf32>
    %cst_39 = arith.constant 1.000000e+00 : f32
    %50 = vector.broadcast %cst_39 : f32 to vector<8x128xf32>
    %51 = arith.addf %50, %49 : vector<8x128xf32>
    %52 = arith.divf %50, %51 : vector<8x128xf32>
    %53 = vector.extract_strided_slice %46 {offsets = [0, 128], sizes = [8, 128], strides = [1, 1]} : vector<8x512xf32> to vector<8x128xf32>
    %54 = arith.negf %53 : vector<8x128xf32>
    %55 = math.exp %54 : vector<8x128xf32>
    %cst_40 = arith.constant 1.000000e+00 : f32
    %56 = vector.broadcast %cst_40 : f32 to vector<8x128xf32>
    %57 = arith.addf %56, %55 : vector<8x128xf32>
    %58 = arith.divf %56, %57 : vector<8x128xf32>
    %59 = vector.extract_strided_slice %46 {offsets = [0, 256], sizes = [8, 128], strides = [1, 1]} : vector<8x512xf32> to vector<8x128xf32>
    %60 = math.tanh %59 : vector<8x128xf32>
    %61 = vector.extract_strided_slice %46 {offsets = [0, 384], sizes = [8, 128], strides = [1, 1]} : vector<8x512xf32> to vector<8x128xf32>
    %62 = arith.negf %61 : vector<8x128xf32>
    %63 = math.exp %62 : vector<8x128xf32>
    %cst_41 = arith.constant 1.000000e+00 : f32
    %64 = vector.broadcast %cst_41 : f32 to vector<8x128xf32>
    %65 = arith.addf %64, %63 : vector<8x128xf32>
    %66 = arith.divf %64, %65 : vector<8x128xf32>
    %67 = arith.mulf %58, %39 : vector<8x128xf32>
    %68 = arith.mulf %52, %60 : vector<8x128xf32>
    %69 = arith.addf %67, %68 : vector<8x128xf32>
    %70 = math.tanh %69 : vector<8x128xf32>
    %71 = arith.mulf %66, %70 : vector<8x128xf32>
    %c0_42 = arith.constant 0 : index
    %c0_43 = arith.constant 0 : index
    %c0_44 = arith.constant 0 : index
    %72 = vector.load %arg13[%c0_42, %c0_43, %c0_44] : memref<2x8x128xf32, #tpu.memory_space<vmem>>, vector<1x8x128xf32>
    %73 = vector.shape_cast %72 : vector<1x8x128xf32> to vector<8x128xf32>
    %74 = vector.shape_cast %71 : vector<8x128xf32> to vector<1x8x128xf32>
    tpu.vector_store %arg13[%c0_42, %c0_43, %c0_44], %74 {strides = array<i32>} : memref<2x8x128xf32, #tpu.memory_space<vmem>>, vector<1x8x128xf32>,
    %c0_45 = arith.constant 0 : index
    %c0_46 = arith.constant 0 : index
    %c0_47 = arith.constant 0 : index
    %75 = vector.load %arg14[%c0_45, %c0_46, %c0_47] : memref<2x8x128xf32, #tpu.memory_space<vmem>>, vector<1x8x128xf32>
    %76 = vector.shape_cast %75 : vector<1x8x128xf32> to vector<8x128xf32>
    %77 = vector.shape_cast %69 : vector<8x128xf32> to vector<1x8x128xf32>
    tpu.vector_store %arg14[%c0_45, %c0_46, %c0_47], %77 {strides = array<i32>} : memref<2x8x128xf32, #tpu.memory_space<vmem>>, vector<1x8x128xf32>,
    %c0_48 = arith.constant 0 : index
    %c0_49 = arith.constant 0 : index
    %78 = vector.load %arg7[%c0_48, %c0_49] : memref<128x512xbf16, #tpu.memory_space<vmem>>, vector<128x512xbf16>
    %c0_50 = arith.constant 0 : index
    %c0_51 = arith.constant 0 : index
    %79 = vector.load %arg8[%c0_50, %c0_51] : memref<128x512xbf16, #tpu.memory_space<vmem>>, vector<128x512xbf16>
    %c0_52 = arith.constant 0 : index
    %c0_53 = arith.constant 0 : index
    %80 = vector.load %arg9[%c0_52, %c0_53] : memref<1x512xf32, #tpu.memory_space<vmem>>, vector<1x512xf32>
    %c1_54 = arith.constant 1 : index
    %c0_55 = arith.constant 0 : index
    %c0_56 = arith.constant 0 : index
    %81 = vector.load %arg2[%c1_54, %c0_55, %c0_56] : memref<2x8x128xf32, #tpu.memory_space<vmem>>, vector<1x8x128xf32>
    %82 = vector.shape_cast %81 : vector<1x8x128xf32> to vector<8x128xf32>
    %c1_57 = arith.constant 1 : index
    %c0_58 = arith.constant 0 : index
    %c0_59 = arith.constant 0 : index
    %83 = vector.load %arg3[%c1_57, %c0_58, %c0_59] : memref<2x8x128xf32, #tpu.memory_space<vmem>>, vector<1x8x128xf32>
    %84 = vector.shape_cast %83 : vector<1x8x128xf32> to vector<8x128xf32>
    %85 = arith.truncf %71 : vector<8x128xf32> to vector<8x128xbf16>
    %cst_60 = arith.constant dense<0.000000e+00> : vector<8x512xf32>
    %86 = tpu.matmul %85, %78, %cst_60 {dimension_numbers = #tpu.dot_dimension_numbers<[1], [0], [0], [1], [0, 0, 1, 1], [], []>} : vector<8x128xbf16>, vector<128x512xbf16>, vector<8x512xf32> -> vector<8x512xf32>
    %87 = arith.truncf %82 : vector<8x128xf32> to vector<8x128xbf16>
    %cst_61 = arith.constant dense<0.000000e+00> : vector<8x512xf32>
    %88 = tpu.matmul %87, %79, %cst_61 {dimension_numbers = #tpu.dot_dimension_numbers<[1], [0], [0], [1], [0, 0, 1, 1], [], []>} : vector<8x128xbf16>, vector<128x512xbf16>, vector<8x512xf32> -> vector<8x512xf32>
    %89 = arith.addf %86, %88 : vector<8x512xf32>
    %90 = vector.broadcast %80 : vector<1x512xf32> to vector<8x512xf32>
    %91 = arith.addf %89, %90 : vector<8x512xf32>
    %92 = vector.extract_strided_slice %91 {offsets = [0, 0], sizes = [8, 128], strides = [1, 1]} : vector<8x512xf32> to vector<8x128xf32>
    %93 = arith.negf %92 : vector<8x128xf32>
    %94 = math.exp %93 : vector<8x128xf32>
    %cst_62 = arith.constant 1.000000e+00 : f32
    %95 = vector.broadcast %cst_62 : f32 to vector<8x128xf32>
    %96 = arith.addf %95, %94 : vector<8x128xf32>
    %97 = arith.divf %95, %96 : vector<8x128xf32>
    %98 = vector.extract_strided_slice %91 {offsets = [0, 128], sizes = [8, 128], strides = [1, 1]} : vector<8x512xf32> to vector<8x128xf32>
    %99 = arith.negf %98 : vector<8x128xf32>
    %100 = math.exp %99 : vector<8x128xf32>
    %cst_63 = arith.constant 1.000000e+00 : f32
    %101 = vector.broadcast %cst_63 : f32 to vector<8x128xf32>
    %102 = arith.addf %101, %100 : vector<8x128xf32>
    %103 = arith.divf %101, %102 : vector<8x128xf32>
    %104 = vector.extract_strided_slice %91 {offsets = [0, 256], sizes = [8, 128], strides = [1, 1]} : vector<8x512xf32> to vector<8x128xf32>
    %105 = math.tanh %104 : vector<8x128xf32>
    %106 = vector.extract_strided_slice %91 {offsets = [0, 384], sizes = [8, 128], strides = [1, 1]} : vector<8x512xf32> to vector<8x128xf32>
    %107 = arith.negf %106 : vector<8x128xf32>
    %108 = math.exp %107 : vector<8x128xf32>
    %cst_64 = arith.constant 1.000000e+00 : f32
    %109 = vector.broadcast %cst_64 : f32 to vector<8x128xf32>
    %110 = arith.addf %109, %108 : vector<8x128xf32>
    %111 = arith.divf %109, %110 : vector<8x128xf32>
    %112 = arith.mulf %103, %84 : vector<8x128xf32>
    %113 = arith.mulf %97, %105 : vector<8x128xf32>
    %114 = arith.addf %112, %113 : vector<8x128xf32>
    %115 = math.tanh %114 : vector<8x128xf32>
    %116 = arith.mulf %111, %115 : vector<8x128xf32>
    %c1_65 = arith.constant 1 : index
    %c0_66 = arith.constant 0 : index
    %c0_67 = arith.constant 0 : index
    %117 = vector.load %arg13[%c1_65, %c0_66, %c0_67] : memref<2x8x128xf32, #tpu.memory_space<vmem>>, vector<1x8x128xf32>
    %118 = vector.shape_cast %117 : vector<1x8x128xf32> to vector<8x128xf32>
    %119 = vector.shape_cast %116 : vector<8x128xf32> to vector<1x8x128xf32>
    tpu.vector_store %arg13[%c1_65, %c0_66, %c0_67], %119 {strides = array<i32>} : memref<2x8x128xf32, #tpu.memory_space<vmem>>, vector<1x8x128xf32>,
    %c1_68 = arith.constant 1 : index
    %c0_69 = arith.constant 0 : index
    %c0_70 = arith.constant 0 : index
    %120 = vector.load %arg14[%c1_68, %c0_69, %c0_70] : memref<2x8x128xf32, #tpu.memory_space<vmem>>, vector<1x8x128xf32>
    %121 = vector.shape_cast %120 : vector<1x8x128xf32> to vector<8x128xf32>
    %122 = vector.shape_cast %114 : vector<8x128xf32> to vector<1x8x128xf32>
    tpu.vector_store %arg14[%c1_68, %c0_69, %c0_70], %122 {strides = array<i32>} : memref<2x8x128xf32, #tpu.memory_space<vmem>>, vector<1x8x128xf32>,
    %123 = arith.truncf %116 : vector<8x128xf32> to vector<8x128xbf16>
    %c0_71 = arith.constant 0 : index
    %c0_72 = arith.constant 0 : index
    %124 = vector.load %arg10[%c0_71, %c0_72] : memref<128x128xbf16, #tpu.memory_space<vmem>>, vector<128x128xbf16>
    %cst_73 = arith.constant dense<0.000000e+00> : vector<8x128xf32>
    %125 = tpu.matmul %123, %124, %cst_73 {dimension_numbers = #tpu.dot_dimension_numbers<[1], [0], [0], [1], [0, 0, 1, 1], [], []>} : vector<8x128xbf16>, vector<128x128xbf16>, vector<8x128xf32> -> vector<8x128xf32>
    %c0_74 = arith.constant 0 : index
    %c0_75 = arith.constant 0 : index
    %126 = vector.load %arg11[%c0_74, %c0_75] : memref<1x128xf32, #tpu.memory_space<vmem>>, vector<1x128xf32>
    %127 = vector.broadcast %126 : vector<1x128xf32> to vector<8x128xf32>
    %128 = arith.addf %125, %127 : vector<8x128xf32>
    %c0_76 = arith.constant 0 : index
    %c0_77 = arith.constant 0 : index
    %129 = vector.load %arg12[%c0_76, %c0_77] : memref<8x128xf32, #tpu.memory_space<vmem>>, vector<8x128xf32>
    tpu.vector_store %arg12[%c0_76, %c0_77], %128 {strides = array<i32>} : memref<8x128xf32, #tpu.memory_space<vmem>>, vector<8x128xf32>,
    return
  }
}

</mosaic_0001>

<llo_original>
// kernel: decoder_forward.1
$region0: #{decoder_forward.1}
  #allocation0 [shape = 'u32[]', space=smem, size = 0x4, offset = 0x4, fixed_abs, tag = 'smem constant byte address 0x4 - core index']
  #allocation1 [shape = 'u32[144,128]{1,0:T(1,128)}', space=vmem, size = 0x12000, scoped, tag = 'internal scratch']
  #allocation2 [shape = 'f32[8,16]{1,0:T(8,128)}', space=vmem, size = 0x1000, scoped, tag = 'scratch operand']
  %s0 = inlined_call_operand.vmem [shape: s32[8], index: 0, kind: input, shape index: {}]
  %s1 = inlined_call_operand.vmem [shape: f32[50,16], index: 1, kind: input, shape index: {}]
  %s2 = inlined_call_operand.vmem [shape: f32[2,8,128], index: 2, kind: input, shape index: {}, may-alias: {2,13}]
  %s3 = inlined_call_operand.vmem [shape: f32[2,8,128], index: 3, kind: input, shape index: {}, may-alias: {3,14}]
  %s4 = inlined_call_operand.vmem [shape: bf16[16,512], index: 4, kind: input, shape index: {}]
  %s5 = inlined_call_operand.hbm [shape: bf16[128,512], index: 5, kind: input, shape index: {}]
  %s6 = inlined_call_operand.vmem [shape: f32[1,512], index: 6, kind: input, shape index: {}]
  %s7 = inlined_call_operand.hbm [shape: bf16[128,512], index: 7, kind: input, shape index: {}]
  %s8 = inlined_call_operand.hbm [shape: bf16[128,512], index: 8, kind: input, shape index: {}]
  %s9 = inlined_call_operand.vmem [shape: f32[1,512], index: 9, kind: input, shape index: {}]
  %s10 = inlined_call_operand.vmem [shape: bf16[128,128], index: 10, kind: input, shape index: {}]
  %s11 = inlined_call_operand.vmem [shape: f32[1,128], index: 11, kind: input, shape index: {}]
  %s12 = inlined_call_operand.vmem [shape: f32[8,128], index: 12, kind: output, shape index: {0}]
  %s13 = inlined_call_operand.vmem [shape: f32[2,8,128], index: 13, kind: output, shape index: {1}, may-alias: {2,13}]
  %s14 = inlined_call_operand.vmem [shape: f32[2,8,128], index: 14, kind: output, shape index: {2}, may-alias: {3,14}]
  %15 = xla_tuple %s12, %s13, %s14
  %s16 = sld [smem:[#allocation0]]
  $region90: #{decoder_forward.1} parent=0
    _
  %s18 = ssub.s32 1, %s16
  %s19 = scalar_select 0, %s18, %s16
  $region1: #{decoder_forward.1} parent=0
    #allocation3 [shape = 'u8[512]{0}', space=smem, size = 0x200, scoped, tag = 'input window, operand 0, single buffered']
    #allocation4 [shape = 's32[1]{0}', space=sflag, size = 0x4, scoped, tag = 'scoped memory for decoder_forward.1']
    #allocation5 [shape = 's32[1]{0}', space=sflag, size = 0x4, scoped, tag = 'scoped memory for decoder_forward.1']
    #allocation6 [shape = 'u8[131072]{0}', space=vmem, size = 0x20000, scoped, tag = 'input window, operand 5, single buffered']
    #allocation7 [shape = 'u8[131072]{0}', space=vmem, size = 0x20000, scoped, tag = 'input window, operand 7, single buffered']
    #allocation8 [shape = 's32[1]{0}', space=sflag, size = 0x4, scoped, tag = 'scoped memory for decoder_forward.1']
    #allocation9 [shape = 'u8[131072]{0}', space=vmem, size = 0x20000, scoped, tag = 'input window, operand 8, single buffered']
    %20 = vsyncpa [#allocation5], 0
    %21 = vsyncpa [#allocation4], 0
    %22 = vsyncpa [#allocation8], 0
    // Predicated region
    $region2: #{decoder_forward.1} parent=1 // pred_check
      _
    $region3: #{decoder_forward.1} parent=1 // pred_check_branch
      %24 = sbr.rel (0) target = $region5
    $region4: #{decoder_forward.1} parent=1 // pred_region
      %s26 = ssub.s32 16, 16
      %27 = vsyncadd [#allocation5], %s26
      %s29 = sshll.u32 %s0, 4
      %s30 = int_to_ptr.vmem [resolvable:$true] %s29
      %32 = dma.vmem_to_smem %s30, 16, [#allocation3], [#allocation5]
    $region5: #{decoder_forward.1} parent=1 // pred_fallthru
      _
    // Predicated region
    $region6: #{decoder_forward.1} parent=1 // pred_check
      _
    $region7: #{decoder_forward.1} parent=1 // pred_check_branch
      %34 = sbr.rel (0) target = $region9
    $region8: #{decoder_forward.1} parent=1 // pred_region
      _
    $region9: #{decoder_forward.1} parent=1 // pred_fallthru
      _
    // Predicated region
    $region10: #{decoder_forward.1} parent=1 // pred_check
      _
    $region11: #{decoder_forward.1} parent=1 // pred_check_branch
      %36 = sbr.rel (0) target = $region13
    $region12: #{decoder_forward.1} parent=1 // pred_region
      _
    $region13: #{decoder_forward.1} parent=1 // pred_fallthru
      _
    // Predicated region
    $region14: #{decoder_forward.1} parent=1 // pred_check
      _
    $region15: #{decoder_forward.1} parent=1 // pred_check_branch
      %38 = sbr.rel (0) target = $region17
    $region16: #{decoder_forward.1} parent=1 // pred_region
      _
    $region17: #{decoder_forward.1} parent=1 // pred_fallthru
      _
    // Predicated region
    $region18: #{decoder_forward.1} parent=1 // pred_check
      _
    $region19: #{decoder_forward.1} parent=1 // pred_check_branch
      %40 = sbr.rel (0) target = $region21
    $region20: #{decoder_forward.1} parent=1 // pred_region
      _
    $region21: #{decoder_forward.1} parent=1 // pred_fallthru
      _
    // Predicated region
    $region22: #{decoder_forward.1} parent=1 // pred_check
      _
    $region23: #{decoder_forward.1} parent=1 // pred_check_branch
      %42 = sbr.rel (0) target = $region25
    $region24: #{decoder_forward.1} parent=1 // pred_region
      %s44 = ssub.s32 4096, 4096
      %45 = vsyncadd [#allocation4], %s44
      %s46 = sshll.u32 [#allocation6], 4
      %s47 = int_to_ptr.vmem [resolvable:$true] %s46
      %52 = dma.hbm_to_vmem [thread:$0]  %s5, 4096, %s47, [#allocation4], 256, 256, 16
    $region25: #{decoder_forward.1} parent=1 // pred_fallthru
      _
    // Predicated region
    $region26: #{decoder_forward.1} parent=1 // pred_check
      _
    $region27: #{decoder_forward.1} parent=1 // pred_check_branch
      %54 = sbr.rel (0) target = $region29
    $region28: #{decoder_forward.1} parent=1 // pred_region
      _
    $region29: #{decoder_forward.1} parent=1 // pred_fallthru
      _
    // Predicated region
    $region30: #{decoder_forward.1} parent=1 // pred_check
      _
    $region31: #{decoder_forward.1} parent=1 // pred_check_branch
      %56 = sbr.rel (0) target = $region33
    $region32: #{decoder_forward.1} parent=1 // pred_region
      %s58 = ssub.s32 4096, 4096
      %59 = vsyncadd [#allocation8], %s58
      %s60 = sshll.u32 [#allocation7], 4
      %s61 = int_to_ptr.vmem [resolvable:$true] %s60
      %66 = dma.hbm_to_vmem [thread:$0]  %s7, 4096, %s61, [#allocation8], 256, 256, 16
    $region33: #{decoder_forward.1} parent=1 // pred_fallthru
      _
    // Predicated region
    $region34: #{decoder_forward.1} parent=1 // pred_check
      _
    $region35: #{decoder_forward.1} parent=1 // pred_check_branch
      %68 = sbr.rel (0) target = $region37
    $region36: #{decoder_forward.1} parent=1 // pred_region
      %s70 = ssub.s32 4096, 4096
      %71 = vsyncadd [#allocation8], %s70
      %s72 = sshll.u32 [#allocation9], 4
      %s73 = int_to_ptr.vmem [resolvable:$true] %s72
      %78 = dma.hbm_to_vmem [thread:$0]  %s8, 4096, %s73, [#allocation8], 256, 256, 16
    $region37: #{decoder_forward.1} parent=1 // pred_fallthru
      _
    // Predicated region
    $region38: #{decoder_forward.1} parent=1 // pred_check
      _
    $region39: #{decoder_forward.1} parent=1 // pred_check_branch
      %80 = sbr.rel (0) target = $region41
    $region40: #{decoder_forward.1} parent=1 // pred_region
      _
    $region41: #{decoder_forward.1} parent=1 // pred_fallthru
      _
    // Predicated region
    $region42: #{decoder_forward.1} parent=1 // pred_check
      _
    $region43: #{decoder_forward.1} parent=1 // pred_check_branch
      %82 = sbr.rel (0) target = $region45
    $region44: #{decoder_forward.1} parent=1 // pred_region
      _
    $region45: #{decoder_forward.1} parent=1 // pred_fallthru
      _
    // Predicated region
    $region46: #{decoder_forward.1} parent=1 // pred_check
      _
    $region47: #{decoder_forward.1} parent=1 // pred_check_branch
      %84 = sbr.rel (0) target = $region49
    $region48: #{decoder_forward.1} parent=1 // pred_region
      _
    $region49: #{decoder_forward.1} parent=1 // pred_fallthru
      _
    // Predicated region
    $region50: #{decoder_forward.1} parent=1 // pred_check
      _
    $region51: #{decoder_forward.1} parent=1 // pred_check_branch
      %86 = sbr.rel (0) target = $region53
    $region52: #{decoder_forward.1} parent=1 // pred_region
      %87 = dma.done [#allocation5], 16
    $region53: #{decoder_forward.1} parent=1 // pred_fallthru
      _
    // Predicated region
    $region54: #{decoder_forward.1} parent=1 // pred_check
      _
    $region55: #{decoder_forward.1} parent=1 // pred_check_branch
      %89 = sbr.rel (0) target = $region57
    $region56: #{decoder_forward.1} parent=1 // pred_region
      %90 = dma.done [#allocation4], 4096
    $region57: #{decoder_forward.1} parent=1 // pred_fallthru
      _
    // Predicated region
    $region58: #{decoder_forward.1} parent=1 // pred_check
      _
    $region59: #{decoder_forward.1} parent=1 // pred_check_branch
      %92 = sbr.rel (0) target = $region61
    $region60: #{decoder_forward.1} parent=1 // pred_region
      %93 = dma.done [#allocation8], 4096
    $region61: #{decoder_forward.1} parent=1 // pred_fallthru
      _
    // Predicated region
    $region62: #{decoder_forward.1} parent=1 // pred_check
      _
    $region63: #{decoder_forward.1} parent=1 // pred_check_branch
      %95 = sbr.rel (0) target = $region65
    $region64: #{decoder_forward.1} parent=1 // pred_region
      %96 = dma.done [#allocation8], 4096
    $region65: #{decoder_forward.1} parent=1 // pred_fallthru
      _
    %97 = sfence
    %s99 = sld [smem:[#allocation3]]
    %s100 = scalar_lea.vmem %s1, %s99
    %v101 = vld [vmem:[%s100] sm:$0x1]
    %vm102 = vcmask 122880
    %103 = vst.msk [vmem:[#allocation2] sm:$0x1] %vm102, %v101
    %s104 = sld [smem:[#allocation3 + $0x1]]
    %s105 = scalar_lea.vmem %s1, %s104
    %v106 = vld [vmem:[%s105] sm:$0x1]
    %107 = vst.msk [vmem:[#allocation2 + $0x1] sm:$0x1] %vm102, %v106
    %s108 = sld [smem:[#allocation3 + $0x2]]
    %s109 = scalar_lea.vmem %s1, %s108
    %v110 = vld [vmem:[%s109] sm:$0x1]
    %111 = vst.msk [vmem:[#allocation2 + $0x2] sm:$0x1] %vm102, %v110
    %s112 = sld [smem:[#allocation3 + $0x3]]
    %s113 = scalar_lea.vmem %s1, %s112
    %v114 = vld [vmem:[%s113] sm:$0x1]
    %115 = vst.msk [vmem:[#allocation2 + $0x3] sm:$0x1] %vm102, %v114
    %s116 = sld [smem:[#allocation3 + $0x4]]
    %s117 = scalar_lea.vmem %s1, %s116
    %v118 = vld [vmem:[%s117] sm:$0x1]
    %119 = vst.msk [vmem:[#allocation2 + $0x4] sm:$0x1] %vm102, %v118
    %s120 = sld [smem:[#allocation3 + $0x5]]
    %s121 = scalar_lea.vmem %s1, %s120
    %v122 = vld [vmem:[%s121] sm:$0x1]
    %123 = vst.msk [vmem:[#allocation2 + $0x5] sm:$0x1] %vm102, %v122
    %s124 = sld [smem:[#allocation3 + $0x6]]
    %s125 = scalar_lea.vmem %s1, %s124
    %v126 = vld [vmem:[%s125] sm:$0x1]
    %127 = vst.msk [vmem:[#allocation2 + $0x6] sm:$0x1] %vm102, %v126
    %s128 = sld [smem:[#allocation3 + $0x7]]
    %s129 = scalar_lea.vmem %s1, %s128
    %v130 = vld [vmem:[%s129] sm:$0x1]
    %131 = vst.msk [vmem:[#allocation2 + $0x7] sm:$0x1] %vm102, %v130
    %v132 = vld [vmem:[#allocation2] sm:$0xff]
    %v133 = vld [vmem:[%s4] sm:$0xff]
    %v134 = vld [vmem:[%s4 + $0x8] sm:$0xff]
    %v135 = vld [vmem:[%s4 + $0x10] sm:$0xff]
    %v136 = vld [vmem:[%s4 + $0x18] sm:$0xff]
    %v137 = vld [vmem:[#allocation6] sm:$0xff]
    %v138 = vld [vmem:[#allocation6 + $0x8] sm:$0xff]
    %v139 = vld [vmem:[#allocation6 + $0x10] sm:$0xff]
    %v140 = vld [vmem:[#allocation6 + $0x18] sm:$0xff]
    %v141 = vld [vmem:[#allocation6 + $0x20] sm:$0xff]
    %v142 = vld [vmem:[#allocation6 + $0x28] sm:$0xff]
    %v143 = vld [vmem:[#allocation6 + $0x30] sm:$0xff]
    %v144 = vld [vmem:[#allocation6 + $0x38] sm:$0xff]
    %v145 = vld [vmem:[#allocation6 + $0x40] sm:$0xff]
    %v146 = vld [vmem:[#allocation6 + $0x48] sm:$0xff]
    %v147 = vld [vmem:[#allocation6 + $0x50] sm:$0xff]
    %v148 = vld [vmem:[#allocation6 + $0x58] sm:$0xff]
    %v149 = vld [vmem:[#allocation6 + $0x60] sm:$0xff]
    %v150 = vld [vmem:[#allocation6 + $0x68] sm:$0xff]
    %v151 = vld [vmem:[#allocation6 + $0x70] sm:$0xff]
    %v152 = vld [vmem:[#allocation6 + $0x78] sm:$0xff]
    %v153 = vld [vmem:[#allocation6 + $0x80] sm:$0xff]
    %v154 = vld [vmem:[#allocation6 + $0x88] sm:$0xff]
    %v155 = vld [vmem:[#allocation6 + $0x90] sm:$0xff]
    %v156 = vld [vmem:[#allocation6 + $0x98] sm:$0xff]
    %v157 = vld [vmem:[#allocation6 + $0xa0] sm:$0xff]
    %v158 = vld [vmem:[#allocation6 + $0xa8] sm:$0xff]
    %v159 = vld [vmem:[#allocation6 + $0xb0] sm:$0xff]
    %v160 = vld [vmem:[#allocation6 + $0xb8] sm:$0xff]
    %v161 = vld [vmem:[#allocation6 + $0xc0] sm:$0xff]
    %v162 = vld [vmem:[#allocation6 + $0xc8] sm:$0xff]
    %v163 = vld [vmem:[#allocation6 + $0xd0] sm:$0xff]
    %v164 = vld [vmem:[#allocation6 + $0xd8] sm:$0xff]
    %v165 = vld [vmem:[#allocation6 + $0xe0] sm:$0xff]
    %v166 = vld [vmem:[#allocation6 + $0xe8] sm:$0xff]
    %v167 = vld [vmem:[#allocation6 + $0xf0] sm:$0xff]
    %v168 = vld [vmem:[#allocation6 + $0xf8] sm:$0xff]
    %v169 = vld [vmem:[%s6] sm:$0xf]
    %v170 = vld [vmem:[%s2] sm:$0xff]
    %v171 = vld [vmem:[%s3] sm:$0xff]
    %v172 = vpack.c.bf16 %v132, %v132
    %v173 = vpack.c.bf16 %v170, %v170
    %v206 = vunpack.c.l.b16 %v137
    %v207 = vunpack.c.h.b16 %v137
    %v208 = vunpack.c.l.b16 %v138
    %v209 = vunpack.c.h.b16 %v138
    %v210 = vunpack.c.l.b16 %v139
    %v211 = vunpack.c.h.b16 %v139
    %v212 = vunpack.c.l.b16 %v140
    %v213 = vunpack.c.h.b16 %v140
    %v214 = vunpack.c.l.b16 %v141
    %v215 = vunpack.c.h.b16 %v141
    %v216 = vunpack.c.l.b16 %v142
    %v217 = vunpack.c.h.b16 %v142
    %v218 = vunpack.c.l.b16 %v143
    %v219 = vunpack.c.h.b16 %v143
    %v220 = vunpack.c.l.b16 %v144
    %v221 = vunpack.c.h.b16 %v144
    %v222 = vunpack.c.l.b16 %v145
    %v223 = vunpack.c.h.b16 %v145
    %v224 = vunpack.c.l.b16 %v146
    %v225 = vunpack.c.h.b16 %v146
    %v226 = vunpack.c.l.b16 %v147
    %v227 = vunpack.c.h.b16 %v147
    %v228 = vunpack.c.l.b16 %v148
    %v229 = vunpack.c.h.b16 %v148
    %v230 = vunpack.c.l.b16 %v149
    %v231 = vunpack.c.h.b16 %v149
    %v232 = vunpack.c.l.b16 %v150
    %v233 = vunpack.c.h.b16 %v150
    %v234 = vunpack.c.l.b16 %v151
    %v235 = vunpack.c.h.b16 %v151
    %v236 = vunpack.c.l.b16 %v152
    %v237 = vunpack.c.h.b16 %v152
    %v238 = vunpack.c.l.b16 %v153
    %v239 = vunpack.c.h.b16 %v153
    %v240 = vunpack.c.l.b16 %v154
    %v241 = vunpack.c.h.b16 %v154
    %v242 = vunpack.c.l.b16 %v155
    %v243 = vunpack.c.h.b16 %v155
    %v244 = vunpack.c.l.b16 %v156
    %v245 = vunpack.c.h.b16 %v156
    %v246 = vunpack.c.l.b16 %v157
    %v247 = vunpack.c.h.b16 %v157
    %v248 = vunpack.c.l.b16 %v158
    %v249 = vunpack.c.h.b16 %v158
    %v250 = vunpack.c.l.b16 %v159
    %v251 = vunpack.c.h.b16 %v159
    %v252 = vunpack.c.l.b16 %v160
    %v253 = vunpack.c.h.b16 %v160
    %v254 = vunpack.c.l.b16 %v161
    %v255 = vunpack.c.h.b16 %v161
    %v256 = vunpack.c.l.b16 %v162
    %v257 = vunpack.c.h.b16 %v162
    %v258 = vunpack.c.l.b16 %v163
    %v259 = vunpack.c.h.b16 %v163
    %v260 = vunpack.c.l.b16 %v164
    %v261 = vunpack.c.h.b16 %v164
    %v262 = vunpack.c.l.b16 %v165
    %v263 = vunpack.c.h.b16 %v165
    %v264 = vunpack.c.l.b16 %v166
    %v265 = vunpack.c.h.b16 %v166
    %v266 = vunpack.c.l.b16 %v167
    %v267 = vunpack.c.h.b16 %v167
    %v268 = vunpack.c.l.b16 %v168
    %v269 = vunpack.c.h.b16 %v168
    %v270 = vpack.c.b16 %v210, %v206
    %v271 = vpack.c.b16 %v211, %v207
    %v272 = vpack.c.b16 %v212, %v208
    %v273 = vpack.c.b16 %v213, %v209
    %v274 = vpack.c.b16 %v218, %v214
    %v275 = vpack.c.b16 %v219, %v215
    %v276 = vpack.c.b16 %v220, %v216
    %v277 = vpack.c.b16 %v221, %v217
    %v278 = vpack.c.b16 %v226, %v222
    %v279 = vpack.c.b16 %v227, %v223
    %v280 = vpack.c.b16 %v228, %v224
    %v281 = vpack.c.b16 %v229, %v225
    %v282 = vpack.c.b16 %v234, %v230
    %v283 = vpack.c.b16 %v235, %v231
    %v284 = vpack.c.b16 %v236, %v232
    %v285 = vpack.c.b16 %v237, %v233
    %v286 = vpack.c.b16 %v242, %v238
    %v287 = vpack.c.b16 %v243, %v239
    %v288 = vpack.c.b16 %v244, %v240
    %v289 = vpack.c.b16 %v245, %v241
    %v290 = vpack.c.b16 %v250, %v246
    %v291 = vpack.c.b16 %v251, %v247
    %v292 = vpack.c.b16 %v252, %v248
    %v293 = vpack.c.b16 %v253, %v249
    %v294 = vpack.c.b16 %v258, %v254
    %v295 = vpack.c.b16 %v259, %v255
    %v296 = vpack.c.b16 %v260, %v256
    %v297 = vpack.c.b16 %v261, %v257
    %v298 = vpack.c.b16 %v266, %v262
    %v299 = vpack.c.b16 %v267, %v263
    %v300 = vpack.c.b16 %v268, %v264
    %v301 = vpack.c.b16 %v269, %v265
    %334 = vmatprep.subr.bf16.mxu0 %v271
    %335 = vmatpush1.bf16.msra.mxu0 %v270
    %336 = vmatprep.subr.bf16.mxu0 %v275
    %337 = vmatpush1.bf16.msra.mxu0 %v274
    %338 = vmatprep.subr.bf16.mxu0 %v279
    %339 = vmatpush1.bf16.msra.mxu0 %v278
    %340 = vmatprep.subr.bf16.mxu0 %v283
    %341 = vmatpush1.bf16.msra.mxu0 %v282
    %342 = vmatprep.subr.bf16.mxu0 %v287
    %343 = vmatpush1.bf16.msra.mxu0 %v286
    %344 = vmatprep.subr.bf16.mxu0 %v291
    %345 = vmatpush1.bf16.msra.mxu0 %v290
    %346 = vmatprep.subr.bf16.mxu0 %v295
    %347 = vmatpush1.bf16.msra.mxu0 %v294
    %348 = vmatprep.subr.bf16.mxu0 %v299
    %349 = vmatpush1.bf16.msra.mxu0 %v298
    %350 = vmatprep.subr.bf16.mxu0 0
    %351 = vmatpush1.bf16.msra.mxu0 0
    %352 = vmatprep.subr.bf16.mxu0 0
    %353 = vmatpush1.bf16.msra.mxu0 0
    %354 = vmatprep.subr.bf16.mxu0 0
    %355 = vmatpush1.bf16.msra.mxu0 0
    %356 = vmatprep.subr.bf16.mxu0 0
    %357 = vmatpush1.bf16.msra.mxu0 0
    %358 = vmatprep.subr.bf16.mxu0 0
    %359 = vmatpush1.bf16.msra.mxu0 0
    %360 = vmatprep.subr.bf16.mxu0 0
    %361 = vmatpush1.bf16.msra.mxu0 0
    %362 = vmatprep.subr.bf16.mxu0 0
    %363 = vmatpush1.bf16.msra.mxu0 0
    %364 = vmatprep.subr.bf16.mxu0 0
    %365 = vmatpush1.bf16.msra.mxu0 0
    %366 = vmatprep.mubr.bf16.mxu0 0
    %367 = vmatmul.mubr.bf16.gmra.mrb[0].mxu0 %v173
    %v368 = vpop.f32.mrb[0].mxu0
    %v369 = vadd.f32 0.0, %v368
    %v370 = vpop.f32.mrb[0].mxu0
    %v371 = vadd.f32 0.0, %v370
    %v372 = vpop.f32.mrb[0].mxu0
    %v373 = vpop.f32.mrb[0].mxu0
    %374 = vdwg.mxu0
    %375 = vmatprep.subr.bf16.mxu0 %v273
    %376 = vmatpush1.bf16.msra.mxu0 %v272
    %377 = vmatprep.subr.bf16.mxu0 %v277
    %378 = vmatpush1.bf16.msra.mxu0 %v276
    %379 = vmatprep.subr.bf16.mxu0 %v281
    %380 = vmatpush1.bf16.msra.mxu0 %v280
    %381 = vmatprep.subr.bf16.mxu0 %v285
    %382 = vmatpush1.bf16.msra.mxu0 %v284
    %383 = vmatprep.subr.bf16.mxu0 %v289
    %384 = vmatpush1.bf16.msra.mxu0 %v288
    %385 = vmatprep.subr.bf16.mxu0 %v293
    %386 = vmatpush1.bf16.msra.mxu0 %v292
    %387 = vmatprep.subr.bf16.mxu0 %v297
    %388 = vmatpush1.bf16.msra.mxu0 %v296
    %389 = vmatprep.subr.bf16.mxu0 %v301
    %390 = vmatpush1.bf16.msra.mxu0 %v300
    %391 = vmatprep.subr.bf16.mxu0 0
    %392 = vmatpush1.bf16.msra.mxu0 0
    %393 = vmatprep.subr.bf16.mxu0 0
    %394 = vmatpush1.bf16.msra.mxu0 0
    %395 = vmatprep.subr.bf16.mxu0 0
    %396 = vmatpush1.bf16.msra.mxu0 0
    %397 = vmatprep.subr.bf16.mxu0 0
    %398 = vmatpush1.bf16.msra.mxu0 0
    %399 = vmatprep.subr.bf16.mxu0 0
    %400 = vmatpush1.bf16.msra.mxu0 0
    %401 = vmatprep.subr.bf16.mxu0 0
    %402 = vmatpush1.bf16.msra.mxu0 0
    %403 = vmatprep.subr.bf16.mxu0 0
    %404 = vmatpush1.bf16.msra.mxu0 0
    %405 = vmatprep.subr.bf16.mxu0 0
    %406 = vmatpush1.bf16.msra.mxu0 0
    %407 = vmatprep.mubr.bf16.mxu0 0
    %408 = vmatmul.mubr.bf16.gmra.mrb[0].mxu0 %v173
    %v409 = vpop.f32.mrb[0].mxu0
    %v410 = vadd.f32 0.0, %v409
    %v411 = vpop.f32.mrb[0].mxu0
    %v412 = vadd.f32 0.0, %v411
    %v413 = vpop.f32.mrb[0].mxu0
    %v414 = vpop.f32.mrb[0].mxu0
    %415 = vdwg.mxu0
    %v420 = vunpack.c.l.b16 %v133
    %v421 = vunpack.c.h.b16 %v133
    %v422 = vunpack.c.l.b16 %v134
    %v423 = vunpack.c.h.b16 %v134
    %v424 = vunpack.c.l.b16 %v135
    %v425 = vunpack.c.h.b16 %v135
    %v426 = vunpack.c.l.b16 %v136
    %v427 = vunpack.c.h.b16 %v136
    %v428 = vpack.c.b16 %v424, %v420
    %v429 = vpack.c.b16 %v425, %v421
    %v430 = vpack.c.b16 %v426, %v422
    %v431 = vpack.c.b16 %v427, %v423
    %vm436 = vcmask 130048
    %v438 = vsel %vm436, %v172, 0
    %440 = vmatprep.subr.bf16.mxu0 %v429
    %441 = vmatpush1.bf16.msra.mxu0 %v428
    %442 = vmatprep.subr.bf16.mxu0 0
    %443 = vmatpush1.bf16.msra.mxu0 0
    %444 = vmatprep.subr.bf16.mxu0 0
    %445 = vmatpush1.bf16.msra.mxu0 0
    %446 = vmatprep.subr.bf16.mxu0 0
    %447 = vmatpush1.bf16.msra.mxu0 0
    %448 = vmatprep.subr.bf16.mxu0 0
    %449 = vmatpush1.bf16.msra.mxu0 0
    %450 = vmatprep.subr.bf16.mxu0 0
    %451 = vmatpush1.bf16.msra.mxu0 0
    %452 = vmatprep.subr.bf16.mxu0 0
    %453 = vmatpush1.bf16.msra.mxu0 0
    %454 = vmatprep.subr.bf16.mxu0 0
    %455 = vmatpush1.bf16.msra.mxu0 0
    %456 = vmatprep.subr.bf16.mxu0 0
    %457 = vmatpush1.bf16.msra.mxu0 0
    %458 = vmatprep.subr.bf16.mxu0 0
    %459 = vmatpush1.bf16.msra.mxu0 0
    %460 = vmatprep.subr.bf16.mxu0 0
    %461 = vmatpush1.bf16.msra.mxu0 0
    %462 = vmatprep.subr.bf16.mxu0 0
    %463 = vmatpush1.bf16.msra.mxu0 0
    %464 = vmatprep.subr.bf16.mxu0 0
    %465 = vmatpush1.bf16.msra.mxu0 0
    %466 = vmatprep.subr.bf16.mxu0 0
    %467 = vmatpush1.bf16.msra.mxu0 0
    %468 = vmatprep.subr.bf16.mxu0 0
    %469 = vmatpush1.bf16.msra.mxu0 0
    %470 = vmatprep.subr.bf16.mxu0 0
    %471 = vmatpush1.bf16.msra.mxu0 0
    %472 = vmatprep.mubr.bf16.mxu0 0
    %473 = vmatmul.mubr.bf16.gmra.mrb[0].mxu0 %v438
    %v474 = vpop.f32.mrb[0].mxu0
    %v475 = vadd.f32 %v369, %v474
    %v476 = vpop.f32.mrb[0].mxu0
    %v477 = vadd.f32 %v371, %v476
    %v478 = vpop.f32.mrb[0].mxu0
    %v479 = vpop.f32.mrb[0].mxu0
    %480 = vdwg.mxu0
    %481 = vmatprep.subr.bf16.mxu0 %v431
    %482 = vmatpush1.bf16.msra.mxu0 %v430
    %483 = vmatprep.subr.bf16.mxu0 0
    %484 = vmatpush1.bf16.msra.mxu0 0
    %485 = vmatprep.subr.bf16.mxu0 0
    %486 = vmatpush1.bf16.msra.mxu0 0
    %487 = vmatprep.subr.bf16.mxu0 0
    %488 = vmatpush1.bf16.msra.mxu0 0
    %489 = vmatprep.subr.bf16.mxu0 0
    %490 = vmatpush1.bf16.msra.mxu0 0
    %491 = vmatprep.subr.bf16.mxu0 0
    %492 = vmatpush1.bf16.msra.mxu0 0
    %493 = vmatprep.subr.bf16.mxu0 0
    %494 = vmatpush1.bf16.msra.mxu0 0
    %495 = vmatprep.subr.bf16.mxu0 0
    %496 = vmatpush1.bf16.msra.mxu0 0
    %497 = vmatprep.subr.bf16.mxu0 0
    %498 = vmatpush1.bf16.msra.mxu0 0
    %499 = vmatprep.subr.bf16.mxu0 0
    %500 = vmatpush1.bf16.msra.mxu0 0
    %501 = vmatprep.subr.bf16.mxu0 0
    %502 = vmatpush1.bf16.msra.mxu0 0
    %503 = vmatprep.subr.bf16.mxu0 0
    %504 = vmatpush1.bf16.msra.mxu0 0
    %505 = vmatprep.subr.bf16.mxu0 0
    %506 = vmatpush1.bf16.msra.mxu0 0
    %507 = vmatprep.subr.bf16.mxu0 0
    %508 = vmatpush1.bf16.msra.mxu0 0
    %509 = vmatprep.subr.bf16.mxu0 0
    %510 = vmatpush1.bf16.msra.mxu0 0
    %511 = vmatprep.subr.bf16.mxu0 0
    %512 = vmatpush1.bf16.msra.mxu0 0
    %513 = vmatprep.mubr.bf16.mxu0 0
    %514 = vmatmul.mubr.bf16.gmra.mrb[0].mxu0 %v438
    %v515 = vpop.f32.mrb[0].mxu0
    %v516 = vadd.f32 %v410, %v515
    %v517 = vpop.f32.mrb[0].mxu0
    %v518 = vadd.f32 %v412, %v517
    %v519 = vpop.f32.mrb[0].mxu0
    %v520 = vpop.f32.mrb[0].mxu0
    %521 = vdwg.mxu0
    %v523 = vlaneseq
    %v524 = vshrl.u32 %v523, 7
    %v525 = vsub.s32 0, %v524
    %v526 = vrot.slane %v169, %v525
    %v527 = vlaneseq
    %v528 = vshrl.u32 %v527, 7
    %v529 = vsub.s32 1, %v528
    %v530 = vrot.slane %v169, %v529
    %v531 = vlaneseq
    %v532 = vshrl.u32 %v531, 7
    %v533 = vsub.s32 2, %v532
    %v534 = vrot.slane %v169, %v533
    %v535 = vlaneseq
    %v536 = vshrl.u32 %v535, 7
    %v537 = vsub.s32 3, %v536
    %v538 = vrot.slane %v169, %v537
    %v543 = vadd.f32 %v475, %v526
    %v544 = vadd.f32 %v477, %v530
    %v545 = vadd.f32 %v516, %v534
    %v546 = vadd.f32 %v518, %v538
    %v547 = vxor.u32 %v543, 2147483648
    %v548 = vmul.f32 %v547, 1.442695
    %v549 = vpow.pop %v548
    %v550 = vadd.f32 %v549, 1.0
    %v551 = vrcp.pop %v550
    %v552 = vmul.f32 1.0, %v551
    %v553 = vxor.u32 %v544, 2147483648
    %v554 = vmul.f32 %v553, 1.442695
    %v555 = vpow.pop %v554
    %v556 = vadd.f32 %v555, 1.0
    %v557 = vrcp.pop %v556
    %v558 = vmul.f32 1.0, %v557
    %v559 = vtanh.pop %v545
    %v560 = vxor.u32 %v546, 2147483648
    %v561 = vmul.f32 %v560, 1.442695
    %v562 = vpow.pop %v561
    %v563 = vadd.f32 %v562, 1.0
    %v564 = vrcp.pop %v563
    %v565 = vmul.f32 1.0, %v564
    %v566 = vmul.f32 %v558, %v171
    %v567 = vmul.f32 %v552, %v559
    %v568 = vadd.f32 %v566, %v567
    %v569 = vtanh.pop %v568
    %v570 = vmul.f32 %v565, %v569
    %571 = vst [vmem:[%s13] sm:$0xff] %v570
    %572 = vst [vmem:[%s14] sm:$0xff] %v568
    %v573 = vld [vmem:[#allocation7] sm:$0xff]
    %v574 = vld [vmem:[#allocation7 + $0x8] sm:$0xff]
    %v575 = vld [vmem:[#allocation7 + $0x10] sm:$0xff]
    %v576 = vld [vmem:[#allocation7 + $0x18] sm:$0xff]
    %v577 = vld [vmem:[#allocation7 + $0x20] sm:$0xff]
    %v578 = vld [vmem:[#allocation7 + $0x28] sm:$0xff]
    %v579 = vld [vmem:[#allocation7 + $0x30] sm:$0xff]
    %v580 = vld [vmem:[#allocation7 + $0x38] sm:$0xff]
    %v581 = vld [vmem:[#allocation7 + $0x40] sm:$0xff]
    %v582 = vld [vmem:[#allocation7 + $0x48] sm:$0xff]
    %v583 = vld [vmem:[#allocation7 + $0x50] sm:$0xff]
    %v584 = vld [vmem:[#allocation7 + $0x58] sm:$0xff]
    %v585 = vld [vmem:[#allocation7 + $0x60] sm:$0xff]
    %v586 = vld [vmem:[#allocation7 + $0x68] sm:$0xff]
    %v587 = vld [vmem:[#allocation7 + $0x70] sm:$0xff]
    %v588 = vld [vmem:[#allocation7 + $0x78] sm:$0xff]
    %v589 = vld [vmem:[#allocation7 + $0x80] sm:$0xff]
    %v590 = vld [vmem:[#allocation7 + $0x88] sm:$0xff]
    %v591 = vld [vmem:[#allocation7 + $0x90] sm:$0xff]
    %v592 = vld [vmem:[#allocation7 + $0x98] sm:$0xff]
    %v593 = vld [vmem:[#allocation7 + $0xa0] sm:$0xff]
    %v594 = vld [vmem:[#allocation7 + $0xa8] sm:$0xff]
    %v595 = vld [vmem:[#allocation7 + $0xb0] sm:$0xff]
    %v596 = vld [vmem:[#allocation7 + $0xb8] sm:$0xff]
    %v597 = vld [vmem:[#allocation7 + $0xc0] sm:$0xff]
    %v598 = vld [vmem:[#allocation7 + $0xc8] sm:$0xff]
    %v599 = vld [vmem:[#allocation7 + $0xd0] sm:$0xff]
    %v600 = vld [vmem:[#allocation7 + $0xd8] sm:$0xff]
    %v601 = vld [vmem:[#allocation7 + $0xe0] sm:$0xff]
    %v602 = vld [vmem:[#allocation7 + $0xe8] sm:$0xff]
    %v603 = vld [vmem:[#allocation7 + $0xf0] sm:$0xff]
    %v604 = vld [vmem:[#allocation7 + $0xf8] sm:$0xff]
    %v605 = vld [vmem:[#allocation9] sm:$0xff]
    %v606 = vld [vmem:[#allocation9 + $0x8] sm:$0xff]
    %v607 = vld [vmem:[#allocation9 + $0x10] sm:$0xff]
    %v608 = vld [vmem:[#allocation9 + $0x18] sm:$0xff]
    %v609 = vld [vmem:[#allocation9 + $0x20] sm:$0xff]
    %v610 = vld [vmem:[#allocation9 + $0x28] sm:$0xff]
    %v611 = vld [vmem:[#allocation9 + $0x30] sm:$0xff]
    %v612 = vld [vmem:[#allocation9 + $0x38] sm:$0xff]
    %v613 = vld [vmem:[#allocation9 + $0x40] sm:$0xff]
    %v614 = vld [vmem:[#allocation9 + $0x48] sm:$0xff]
    %v615 = vld [vmem:[#allocation9 + $0x50] sm:$0xff]
    %v616 = vld [vmem:[#allocation9 + $0x58] sm:$0xff]
    %v617 = vld [vmem:[#allocation9 + $0x60] sm:$0xff]
    %v618 = vld [vmem:[#allocation9 + $0x68] sm:$0xff]
    %v619 = vld [vmem:[#allocation9 + $0x70] sm:$0xff]
    %v620 = vld [vmem:[#allocation9 + $0x78] sm:$0xff]
    %v621 = vld [vmem:[#allocation9 + $0x80] sm:$0xff]
    %v622 = vld [vmem:[#allocation9 + $0x88] sm:$0xff]
    %v623 = vld [vmem:[#allocation9 + $0x90] sm:$0xff]
    %v624 = vld [vmem:[#allocation9 + $0x98] sm:$0xff]
    %v625 = vld [vmem:[#allocation9 + $0xa0] sm:$0xff]
    %v626 = vld [vmem:[#allocation9 + $0xa8] sm:$0xff]
    %v627 = vld [vmem:[#allocation9 + $0xb0] sm:$0xff]
    %v628 = vld [vmem:[#allocation9 + $0xb8] sm:$0xff]
    %v629 = vld [vmem:[#allocation9 + $0xc0] sm:$0xff]
    %v630 = vld [vmem:[#allocation9 + $0xc8] sm:$0xff]
    %v631 = vld [vmem:[#allocation9 + $0xd0] sm:$0xff]
    %v632 = vld [vmem:[#allocation9 + $0xd8] sm:$0xff]
    %v633 = vld [vmem:[#allocation9 + $0xe0] sm:$0xff]
    %v634 = vld [vmem:[#allocation9 + $0xe8] sm:$0xff]
    %v635 = vld [vmem:[#allocation9 + $0xf0] sm:$0xff]
    %v636 = vld [vmem:[#allocation9 + $0xf8] sm:$0xff]
    %v637 = vld [vmem:[%s9] sm:$0xf]
    %s638 = scalar_lea.vmem %s2, 8
    %v639 = vld [vmem:[%s638] sm:$0xff]
    %s640 = scalar_lea.vmem %s3, 8
    %v641 = vld [vmem:[%s640] sm:$0xff]
    %v642 = vpack.c.bf16 %v570, %v570
    %v643 = vpack.c.bf16 %v639, %v639
    %v676 = vunpack.c.l.b16 %v605
    %v677 = vunpack.c.h.b16 %v605
    %v678 = vunpack.c.l.b16 %v606
    %v679 = vunpack.c.h.b16 %v606
    %v680 = vunpack.c.l.b16 %v607
    %v681 = vunpack.c.h.b16 %v607
    %v682 = vunpack.c.l.b16 %v608
    %v683 = vunpack.c.h.b16 %v608
    %v684 = vunpack.c.l.b16 %v609
    %v685 = vunpack.c.h.b16 %v609
    %v686 = vunpack.c.l.b16 %v610
    %v687 = vunpack.c.h.b16 %v610
    %v688 = vunpack.c.l.b16 %v611
    %v689 = vunpack.c.h.b16 %v611
    %v690 = vunpack.c.l.b16 %v612
    %v691 = vunpack.c.h.b16 %v612
    %v692 = vunpack.c.l.b16 %v613
    %v693 = vunpack.c.h.b16 %v613
    %v694 = vunpack.c.l.b16 %v614
    %v695 = vunpack.c.h.b16 %v614
    %v696 = vunpack.c.l.b16 %v615
    %v697 = vunpack.c.h.b16 %v615
    %v698 = vunpack.c.l.b16 %v616
    %v699 = vunpack.c.h.b16 %v616
    %v700 = vunpack.c.l.b16 %v617
    %v701 = vunpack.c.h.b16 %v617
    %v702 = vunpack.c.l.b16 %v618
    %v703 = vunpack.c.h.b16 %v618
    %v704 = vunpack.c.l.b16 %v619
    %v705 = vunpack.c.h.b16 %v619
    %v706 = vunpack.c.l.b16 %v620
    %v707 = vunpack.c.h.b16 %v620
    %v708 = vunpack.c.l.b16 %v621
    %v709 = vunpack.c.h.b16 %v621
    %v710 = vunpack.c.l.b16 %v622
    %v711 = vunpack.c.h.b16 %v622
    %v712 = vunpack.c.l.b16 %v623
    %v713 = vunpack.c.h.b16 %v623
    %v714 = vunpack.c.l.b16 %v624
    %v715 = vunpack.c.h.b16 %v624
    %v716 = vunpack.c.l.b16 %v625
    %v717 = vunpack.c.h.b16 %v625
    %v718 = vunpack.c.l.b16 %v626
    %v719 = vunpack.c.h.b16 %v626
    %v720 = vunpack.c.l.b16 %v627
    %v721 = vunpack.c.h.b16 %v627
    %v722 = vunpack.c.l.b16 %v628
    %v723 = vunpack.c.h.b16 %v628
    %v724 = vunpack.c.l.b16 %v629
    %v725 = vunpack.c.h.b16 %v629
    %v726 = vunpack.c.l.b16 %v630
    %v727 = vunpack.c.h.b16 %v630
    %v728 = vunpack.c.l.b16 %v631
    %v729 = vunpack.c.h.b16 %v631
    %v730 = vunpack.c.l.b16 %v632
    %v731 = vunpack.c.h.b16 %v632
    %v732 = vunpack.c.l.b16 %v633
    %v733 = vunpack.c.h.b16 %v633
    %v734 = vunpack.c.l.b16 %v634
    %v735 = vunpack.c.h.b16 %v634
    %v736 = vunpack.c.l.b16 %v635
    %v737 = vunpack.c.h.b16 %v635
    %v738 = vunpack.c.l.b16 %v636
    %v739 = vunpack.c.h.b16 %v636
    %v740 = vpack.c.b16 %v680, %v676
    %v741 = vpack.c.b16 %v681, %v677
    %v742 = vpack.c.b16 %v682, %v678
    %v743 = vpack.c.b16 %v683, %v679
    %v744 = vpack.c.b16 %v688, %v684
    %v745 = vpack.c.b16 %v689, %v685
    %v746 = vpack.c.b16 %v690, %v686
    %v747 = vpack.c.b16 %v691, %v687
    %v748 = vpack.c.b16 %v696, %v692
    %v749 = vpack.c.b16 %v697, %v693
    %v750 = vpack.c.b16 %v698, %v694
    %v751 = vpack.c.b16 %v699, %v695
    %v752 = vpack.c.b16 %v704, %v700
    %v753 = vpack.c.b16 %v705, %v701
    %v754 = vpack.c.b16 %v706, %v702
    %v755 = vpack.c.b16 %v707, %v703
    %v756 = vpack.c.b16 %v712, %v708
    %v757 = vpack.c.b16 %v713, %v709
    %v758 = vpack.c.b16 %v714, %v710
    %v759 = vpack.c.b16 %v715, %v711
    %v760 = vpack.c.b16 %v720, %v716
    %v761 = vpack.c.b16 %v721, %v717
    %v762 = vpack.c.b16 %v722, %v718
    %v763 = vpack.c.b16 %v723, %v719
    %v764 = vpack.c.b16 %v728, %v724
    %v765 = vpack.c.b16 %v729, %v725
    %v766 = vpack.c.b16 %v730, %v726
    %v767 = vpack.c.b16 %v731, %v727
    %v768 = vpack.c.b16 %v736, %v732
    %v769 = vpack.c.b16 %v737, %v733
    %v770 = vpack.c.b16 %v738, %v734
    %v771 = vpack.c.b16 %v739, %v735
    %804 = vmatprep.subr.bf16.mxu0 %v741
    %805 = vmatpush1.bf16.msra.mxu0 %v740
    %806 = vmatprep.subr.bf16.mxu0 %v745
    %807 = vmatpush1.bf16.msra.mxu0 %v744
    %808 = vmatprep.subr.bf16.mxu0 %v749
    %809 = vmatpush1.bf16.msra.mxu0 %v748
    %810 = vmatprep.subr.bf16.mxu0 %v753
    %811 = vmatpush1.bf16.msra.mxu0 %v752
    %812 = vmatprep.subr.bf16.mxu0 %v757
    %813 = vmatpush1.bf16.msra.mxu0 %v756
    %814 = vmatprep.subr.bf16.mxu0 %v761
    %815 = vmatpush1.bf16.msra.mxu0 %v760
    %816 = vmatprep.subr.bf16.mxu0 %v765
    %817 = vmatpush1.bf16.msra.mxu0 %v764
    %818 = vmatprep.subr.bf16.mxu0 %v769
    %819 = vmatpush1.bf16.msra.mxu0 %v768
    %820 = vmatprep.subr.bf16.mxu0 0
    %821 = vmatpush1.bf16.msra.mxu0 0
    %822 = vmatprep.subr.bf16.mxu0 0
    %823 = vmatpush1.bf16.msra.mxu0 0
    %824 = vmatprep.subr.bf16.mxu0 0
    %825 = vmatpush1.bf16.msra.mxu0 0
    %826 = vmatprep.subr.bf16.mxu0 0
    %827 = vmatpush1.bf16.msra.mxu0 0
    %828 = vmatprep.subr.bf16.mxu0 0
    %829 = vmatpush1.bf16.msra.mxu0 0
    %830 = vmatprep.subr.bf16.mxu0 0
    %831 = vmatpush1.bf16.msra.mxu0 0
    %832 = vmatprep.subr.bf16.mxu0 0
    %833 = vmatpush1.bf16.msra.mxu0 0
    %834 = vmatprep.subr.bf16.mxu0 0
    %835 = vmatpush1.bf16.msra.mxu0 0
    %836 = vmatprep.mubr.bf16.mxu0 0
    %837 = vmatmul.mubr.bf16.gmra.mrb[0].mxu0 %v643
    %v838 = vpop.f32.mrb[0].mxu0
    %v839 = vadd.f32 0.0, %v838
    %v840 = vpop.f32.mrb[0].mxu0
    %v841 = vadd.f32 0.0, %v840
    %v842 = vpop.f32.mrb[0].mxu0
    %v843 = vpop.f32.mrb[0].mxu0
    %844 = vdwg.mxu0
    %845 = vmatprep.subr.bf16.mxu0 %v743
    %846 = vmatpush1.bf16.msra.mxu0 %v742
    %847 = vmatprep.subr.bf16.mxu0 %v747
    %848 = vmatpush1.bf16.msra.mxu0 %v746
    %849 = vmatprep.subr.bf16.mxu0 %v751
    %850 = vmatpush1.bf16.msra.mxu0 %v750
    %851 = vmatprep.subr.bf16.mxu0 %v755
    %852 = vmatpush1.bf16.msra.mxu0 %v754
    %853 = vmatprep.subr.bf16.mxu0 %v759
    %854 = vmatpush1.bf16.msra.mxu0 %v758
    %855 = vmatprep.subr.bf16.mxu0 %v763
    %856 = vmatpush1.bf16.msra.mxu0 %v762
    %857 = vmatprep.subr.bf16.mxu0 %v767
    %858 = vmatpush1.bf16.msra.mxu0 %v766
    %859 = vmatprep.subr.bf16.mxu0 %v771
    %860 = vmatpush1.bf16.msra.mxu0 %v770
    %861 = vmatprep.subr.bf16.mxu0 0
    %862 = vmatpush1.bf16.msra.mxu0 0
    %863 = vmatprep.subr.bf16.mxu0 0
    %864 = vmatpush1.bf16.msra.mxu0 0
    %865 = vmatprep.subr.bf16.mxu0 0
    %866 = vmatpush1.bf16.msra.mxu0 0
    %867 = vmatprep.subr.bf16.mxu0 0
    %868 = vmatpush1.bf16.msra.mxu0 0
    %869 = vmatprep.subr.bf16.mxu0 0
    %870 = vmatpush1.bf16.msra.mxu0 0
    %871 = vmatprep.subr.bf16.mxu0 0
    %872 = vmatpush1.bf16.msra.mxu0 0
    %873 = vmatprep.subr.bf16.mxu0 0
    %874 = vmatpush1.bf16.msra.mxu0 0
    %875 = vmatprep.subr.bf16.mxu0 0
    %876 = vmatpush1.bf16.msra.mxu0 0
    %877 = vmatprep.mubr.bf16.mxu0 0
    %878 = vmatmul.mubr.bf16.gmra.mrb[0].mxu0 %v643
    %v879 = vpop.f32.mrb[0].mxu0
    %v880 = vadd.f32 0.0, %v879
    %v881 = vpop.f32.mrb[0].mxu0
    %v882 = vadd.f32 0.0, %v881
    %v883 = vpop.f32.mrb[0].mxu0
    %v884 = vpop.f32.mrb[0].mxu0
    %885 = vdwg.mxu0
    %v918 = vunpack.c.l.b16 %v573
    %v919 = vunpack.c.h.b16 %v573
    %v920 = vunpack.c.l.b16 %v574
    %v921 = vunpack.c.h.b16 %v574
    %v922 = vunpack.c.l.b16 %v575
    %v923 = vunpack.c.h.b16 %v575
    %v924 = vunpack.c.l.b16 %v576
    %v925 = vunpack.c.h.b16 %v576
    %v926 = vunpack.c.l.b16 %v577
    %v927 = vunpack.c.h.b16 %v577
    %v928 = vunpack.c.l.b16 %v578
    %v929 = vunpack.c.h.b16 %v578
    %v930 = vunpack.c.l.b16 %v579
    %v931 = vunpack.c.h.b16 %v579
    %v932 = vunpack.c.l.b16 %v580
    %v933 = vunpack.c.h.b16 %v580
    %v934 = vunpack.c.l.b16 %v581
    %v935 = vunpack.c.h.b16 %v581
    %v936 = vunpack.c.l.b16 %v582
    %v937 = vunpack.c.h.b16 %v582
    %v938 = vunpack.c.l.b16 %v583
    %v939 = vunpack.c.h.b16 %v583
    %v940 = vunpack.c.l.b16 %v584
    %v941 = vunpack.c.h.b16 %v584
    %v942 = vunpack.c.l.b16 %v585
    %v943 = vunpack.c.h.b16 %v585
    %v944 = vunpack.c.l.b16 %v586
    %v945 = vunpack.c.h.b16 %v586
    %v946 = vunpack.c.l.b16 %v587
    %v947 = vunpack.c.h.b16 %v587
    %v948 = vunpack.c.l.b16 %v588
    %v949 = vunpack.c.h.b16 %v588
    %v950 = vunpack.c.l.b16 %v589
    %v951 = vunpack.c.h.b16 %v589
    %v952 = vunpack.c.l.b16 %v590
    %v953 = vunpack.c.h.b16 %v590
    %v954 = vunpack.c.l.b16 %v591
    %v955 = vunpack.c.h.b16 %v591
    %v956 = vunpack.c.l.b16 %v592
    %v957 = vunpack.c.h.b16 %v592
    %v958 = vunpack.c.l.b16 %v593
    %v959 = vunpack.c.h.b16 %v593
    %v960 = vunpack.c.l.b16 %v594
    %v961 = vunpack.c.h.b16 %v594
    %v962 = vunpack.c.l.b16 %v595
    %v963 = vunpack.c.h.b16 %v595
    %v964 = vunpack.c.l.b16 %v596
    %v965 = vunpack.c.h.b16 %v596
    %v966 = vunpack.c.l.b16 %v597
    %v967 = vunpack.c.h.b16 %v597
    %v968 = vunpack.c.l.b16 %v598
    %v969 = vunpack.c.h.b16 %v598
    %v970 = vunpack.c.l.b16 %v599
    %v971 = vunpack.c.h.b16 %v599
    %v972 = vunpack.c.l.b16 %v600
    %v973 = vunpack.c.h.b16 %v600
    %v974 = vunpack.c.l.b16 %v601
    %v975 = vunpack.c.h.b16 %v601
    %v976 = vunpack.c.l.b16 %v602
    %v977 = vunpack.c.h.b16 %v602
    %v978 = vunpack.c.l.b16 %v603
    %v979 = vunpack.c.h.b16 %v603
    %v980 = vunpack.c.l.b16 %v604
    %v981 = vunpack.c.h.b16 %v604
    %v982 = vpack.c.b16 %v922, %v918
    %v983 = vpack.c.b16 %v923, %v919
    %v984 = vpack.c.b16 %v924, %v920
    %v985 = vpack.c.b16 %v925, %v921
    %v986 = vpack.c.b16 %v930, %v926
    %v987 = vpack.c.b16 %v931, %v927
    %v988 = vpack.c.b16 %v932, %v928
    %v989 = vpack.c.b16 %v933, %v929
    %v990 = vpack.c.b16 %v938, %v934
    %v991 = vpack.c.b16 %v939, %v935
    %v992 = vpack.c.b16 %v940, %v936
    %v993 = vpack.c.b16 %v941, %v937
    %v994 = vpack.c.b16 %v946, %v942
    %v995 = vpack.c.b16 %v947, %v943
    %v996 = vpack.c.b16 %v948, %v944
    %v997 = vpack.c.b16 %v949, %v945
    %v998 = vpack.c.b16 %v954, %v950
    %v999 = vpack.c.b16 %v955, %v951
    %v1000 = vpack.c.b16 %v956, %v952
    %v1001 = vpack.c.b16 %v957, %v953
    %v1002 = vpack.c.b16 %v962, %v958
    %v1003 = vpack.c.b16 %v963, %v959
    %v1004 = vpack.c.b16 %v964, %v960
    %v1005 = vpack.c.b16 %v965, %v961
    %v1006 = vpack.c.b16 %v970, %v966
    %v1007 = vpack.c.b16 %v971, %v967
    %v1008 = vpack.c.b16 %v972, %v968
    %v1009 = vpack.c.b16 %v973, %v969
    %v1010 = vpack.c.b16 %v978, %v974
    %v1011 = vpack.c.b16 %v979, %v975
    %v1012 = vpack.c.b16 %v980, %v976
    %v1013 = vpack.c.b16 %v981, %v977
    %1046 = vmatprep.subr.bf16.mxu0 %v983
    %1047 = vmatpush1.bf16.msra.mxu0 %v982
    %1048 = vmatprep.subr.bf16.mxu0 %v987
    %1049 = vmatpush1.bf16.msra.mxu0 %v986
    %1050 = vmatprep.subr.bf16.mxu0 %v991
    %1051 = vmatpush1.bf16.msra.mxu0 %v990
    %1052 = vmatprep.subr.bf16.mxu0 %v995
    %1053 = vmatpush1.bf16.msra.mxu0 %v994
    %1054 = vmatprep.subr.bf16.mxu0 %v999
    %1055 = vmatpush1.bf16.msra.mxu0 %v998
    %1056 = vmatprep.subr.bf16.mxu0 %v1003
    %1057 = vmatpush1.bf16.msra.mxu0 %v1002
    %1058 = vmatprep.subr.bf16.mxu0 %v1007
    %1059 = vmatpush1.bf16.msra.mxu0 %v1006
    %1060 = vmatprep.subr.bf16.mxu0 %v1011
    %1061 = vmatpush1.bf16.msra.mxu0 %v1010
    %1062 = vmatprep.subr.bf16.mxu0 0
    %1063 = vmatpush1.bf16.msra.mxu0 0
    %1064 = vmatprep.subr.bf16.mxu0 0
    %1065 = vmatpush1.bf16.msra.mxu0 0
    %1066 = vmatprep.subr.bf16.mxu0 0
    %1067 = vmatpush1.bf16.msra.mxu0 0
    %1068 = vmatprep.subr.bf16.mxu0 0
    %1069 = vmatpush1.bf16.msra.mxu0 0
    %1070 = vmatprep.subr.bf16.mxu0 0
    %1071 = vmatpush1.bf16.msra.mxu0 0
    %1072 = vmatprep.subr.bf16.mxu0 0
    %1073 = vmatpush1.bf16.msra.mxu0 0
    %1074 = vmatprep.subr.bf16.mxu0 0
    %1075 = vmatpush1.bf16.msra.mxu0 0
    %1076 = vmatprep.subr.bf16.mxu0 0
    %1077 = vmatpush1.bf16.msra.mxu0 0
    %1078 = vmatprep.mubr.bf16.mxu0 0
    %1079 = vmatmul.mubr.bf16.gmra.mrb[0].mxu0 %v642
    %v1080 = vpop.f32.mrb[0].mxu0
    %v1081 = vadd.f32 %v839, %v1080
    %v1082 = vpop.f32.mrb[0].mxu0
    %v1083 = vadd.f32 %v841, %v1082
    %v1084 = vpop.f32.mrb[0].mxu0
    %v1085 = vpop.f32.mrb[0].mxu0
    %1086 = vdwg.mxu0
    %1087 = vmatprep.subr.bf16.mxu0 %v985
    %1088 = vmatpush1.bf16.msra.mxu0 %v984
    %1089 = vmatprep.subr.bf16.mxu0 %v989
    %1090 = vmatpush1.bf16.msra.mxu0 %v988
    %1091 = vmatprep.subr.bf16.mxu0 %v993
    %1092 = vmatpush1.bf16.msra.mxu0 %v992
    %1093 = vmatprep.subr.bf16.mxu0 %v997
    %1094 = vmatpush1.bf16.msra.mxu0 %v996
    %1095 = vmatprep.subr.bf16.mxu0 %v1001
    %1096 = vmatpush1.bf16.msra.mxu0 %v1000
    %1097 = vmatprep.subr.bf16.mxu0 %v1005
    %1098 = vmatpush1.bf16.msra.mxu0 %v1004
    %1099 = vmatprep.subr.bf16.mxu0 %v1009
    %1100 = vmatpush1.bf16.msra.mxu0 %v1008
    %1101 = vmatprep.subr.bf16.mxu0 %v1013
    %1102 = vmatpush1.bf16.msra.mxu0 %v1012
    %1103 = vmatprep.subr.bf16.mxu0 0
    %1104 = vmatpush1.bf16.msra.mxu0 0
    %1105 = vmatprep.subr.bf16.mxu0 0
    %1106 = vmatpush1.bf16.msra.mxu0 0
    %1107 = vmatprep.subr.bf16.mxu0 0
    %1108 = vmatpush1.bf16.msra.mxu0 0
    %1109 = vmatprep.subr.bf16.mxu0 0
    %1110 = vmatpush1.bf16.msra.mxu0 0
    %1111 = vmatprep.subr.bf16.mxu0 0
    %1112 = vmatpush1.bf16.msra.mxu0 0
    %1113 = vmatprep.subr.bf16.mxu0 0
    %1114 = vmatpush1.bf16.msra.mxu0 0
    %1115 = vmatprep.subr.bf16.mxu0 0
    %1116 = vmatpush1.bf16.msra.mxu0 0
    %1117 = vmatprep.subr.bf16.mxu0 0
    %1118 = vmatpush1.bf16.msra.mxu0 0
    %1119 = vmatprep.mubr.bf16.mxu0 0
    %1120 = vmatmul.mubr.bf16.gmra.mrb[0].mxu0 %v642
    %v1121 = vpop.f32.mrb[0].mxu0
    %v1122 = vadd.f32 %v880, %v1121
    %v1123 = vpop.f32.mrb[0].mxu0
    %v1124 = vadd.f32 %v882, %v1123
    %v1125 = vpop.f32.mrb[0].mxu0
    %v1126 = vpop.f32.mrb[0].mxu0
    %1127 = vdwg.mxu0
    %v1129 = vlaneseq
    %v1130 = vshrl.u32 %v1129, 7
    %v1131 = vsub.s32 0, %v1130
    %v1132 = vrot.slane %v637, %v1131
    %v1133 = vlaneseq
    %v1134 = vshrl.u32 %v1133, 7
    %v1135 = vsub.s32 1, %v1134
    %v1136 = vrot.slane %v637, %v1135
    %v1137 = vlaneseq
    %v1138 = vshrl.u32 %v1137, 7
    %v1139 = vsub.s32 2, %v1138
    %v1140 = vrot.slane %v637, %v1139
    %v1141 = vlaneseq
    %v1142 = vshrl.u32 %v1141, 7
    %v1143 = vsub.s32 3, %v1142
    %v1144 = vrot.slane %v637, %v1143
    %v1149 = vadd.f32 %v1081, %v1132
    %v1150 = vadd.f32 %v1083, %v1136
    %v1151 = vadd.f32 %v1122, %v1140
    %v1152 = vadd.f32 %v1124, %v1144
    %v1153 = vxor.u32 %v1149, 2147483648
    %v1154 = vmul.f32 %v1153, 1.442695
    %v1155 = vpow.pop %v1154
    %v1156 = vadd.f32 %v1155, 1.0
    %v1157 = vrcp.pop %v1156
    %v1158 = vmul.f32 1.0, %v1157
    %v1159 = vxor.u32 %v1150, 2147483648
    %v1160 = vmul.f32 %v1159, 1.442695
    %v1161 = vpow.pop %v1160
    %v1162 = vadd.f32 %v1161, 1.0
    %v1163 = vrcp.pop %v1162
    %v1164 = vmul.f32 1.0, %v1163
    %v1165 = vtanh.pop %v1151
    %v1166 = vxor.u32 %v1152, 2147483648
    %v1167 = vmul.f32 %v1166, 1.442695
    %v1168 = vpow.pop %v1167
    %v1169 = vadd.f32 %v1168, 1.0
    %v1170 = vrcp.pop %v1169
    %v1171 = vmul.f32 1.0, %v1170
    %v1172 = vmul.f32 %v1164, %v641
    %v1173 = vmul.f32 %v1158, %v1165
    %v1174 = vadd.f32 %v1172, %v1173
    %v1175 = vtanh.pop %v1174
    %v1176 = vmul.f32 %v1171, %v1175
    %s1177 = scalar_lea.vmem %s13, 8
    %1178 = vst [vmem:[%s1177] sm:$0xff] %v1176
    %s1179 = scalar_lea.vmem %s14, 8
    %1180 = vst [vmem:[%s1179] sm:$0xff] %v1174
    %v1181 = vpack.c.bf16 %v1176, %v1176
    %v1182 = vld [vmem:[%s10] sm:$0xf]
    %v1183 = vld [vmem:[%s10 + $0x4] sm:$0xf]
    %v1184 = vld [vmem:[%s10 + $0x8] sm:$0xf]
    %v1185 = vld [vmem:[%s10 + $0xc] sm:$0xf]
    %v1186 = vld [vmem:[%s10 + $0x10] sm:$0xf]
    %v1187 = vld [vmem:[%s10 + $0x14] sm:$0xf]
    %v1188 = vld [vmem:[%s10 + $0x18] sm:$0xf]
    %v1189 = vld [vmem:[%s10 + $0x1c] sm:$0xf]
    %v1190 = vld [vmem:[%s10 + $0x20] sm:$0xf]
    %v1191 = vld [vmem:[%s10 + $0x24] sm:$0xf]
    %v1192 = vld [vmem:[%s10 + $0x28] sm:$0xf]
    %v1193 = vld [vmem:[%s10 + $0x2c] sm:$0xf]
    %v1194 = vld [vmem:[%s10 + $0x30] sm:$0xf]
    %v1195 = vld [vmem:[%s10 + $0x34] sm:$0xf]
    %v1196 = vld [vmem:[%s10 + $0x38] sm:$0xf]
    %v1197 = vld [vmem:[%s10 + $0x3c] sm:$0xf]
    %v1198 = vld [vmem:[%s11] sm:$0x1]
    %v1200 = vlaneseq
    %v1201 = vshrl.u32 %v1200, 7
    %v1202 = vsub.s32 0, %v1201
    %v1203 = vrot.slane %v1198, %v1202
    %v1221 = vunpack.c.l.b16 %v1182
    %v1222 = vunpack.c.l.b16 %v1183
    %v1223 = vunpack.c.l.b16 %v1184
    %v1224 = vunpack.c.l.b16 %v1185
    %v1225 = vunpack.c.l.b16 %v1186
    %v1226 = vunpack.c.l.b16 %v1187
    %v1227 = vunpack.c.l.b16 %v1188
    %v1228 = vunpack.c.l.b16 %v1189
    %v1229 = vunpack.c.l.b16 %v1190
    %v1230 = vunpack.c.l.b16 %v1191
    %v1231 = vunpack.c.l.b16 %v1192
    %v1232 = vunpack.c.l.b16 %v1193
    %v1233 = vunpack.c.l.b16 %v1194
    %v1234 = vunpack.c.l.b16 %v1195
    %v1235 = vunpack.c.l.b16 %v1196
    %v1236 = vunpack.c.l.b16 %v1197
    %v1237 = vpack.c.b16 %v1222, %v1221
    %v1238 = vpack.c.b16 %v1224, %v1223
    %v1239 = vpack.c.b16 %v1226, %v1225
    %v1240 = vpack.c.b16 %v1228, %v1227
    %v1241 = vpack.c.b16 %v1230, %v1229
    %v1242 = vpack.c.b16 %v1232, %v1231
    %v1243 = vpack.c.b16 %v1234, %v1233
    %v1244 = vpack.c.b16 %v1236, %v1235
    %1253 = vmatprep.subr.bf16.mxu0 0
    %1254 = vmatpush1.bf16.msra.mxu0 %v1237
    %1255 = vmatprep.subr.bf16.mxu0 0
    %1256 = vmatpush1.bf16.msra.mxu0 %v1238
    %1257 = vmatprep.subr.bf16.mxu0 0
    %1258 = vmatpush1.bf16.msra.mxu0 %v1239
    %1259 = vmatprep.subr.bf16.mxu0 0
    %1260 = vmatpush1.bf16.msra.mxu0 %v1240
    %1261 = vmatprep.subr.bf16.mxu0 0
    %1262 = vmatpush1.bf16.msra.mxu0 %v1241
    %1263 = vmatprep.subr.bf16.mxu0 0
    %1264 = vmatpush1.bf16.msra.mxu0 %v1242
    %1265 = vmatprep.subr.bf16.mxu0 0
    %1266 = vmatpush1.bf16.msra.mxu0 %v1243
    %1267 = vmatprep.subr.bf16.mxu0 0
    %1268 = vmatpush1.bf16.msra.mxu0 %v1244
    %1269 = vmatprep.subr.bf16.mxu0 0
    %1270 = vmatpush1.bf16.msra.mxu0 0
    %1271 = vmatprep.subr.bf16.mxu0 0
    %1272 = vmatpush1.bf16.msra.mxu0 0
    %1273 = vmatprep.subr.bf16.mxu0 0
    %1274 = vmatpush1.bf16.msra.mxu0 0
    %1275 = vmatprep.subr.bf16.mxu0 0
    %1276 = vmatpush1.bf16.msra.mxu0 0
    %1277 = vmatprep.subr.bf16.mxu0 0
    %1278 = vmatpush1.bf16.msra.mxu0 0
    %1279 = vmatprep.subr.bf16.mxu0 0
    %1280 = vmatpush1.bf16.msra.mxu0 0
    %1281 = vmatprep.subr.bf16.mxu0 0
    %1282 = vmatpush1.bf16.msra.mxu0 0
    %1283 = vmatprep.subr.bf16.mxu0 0
    %1284 = vmatpush1.bf16.msra.mxu0 0
    %1285 = vmatprep.mubr.bf16.mxu0 0
    %1286 = vmatmul.mubr.bf16.gmra.mrb[0].mxu0 %v1181
    %v1287 = vpop.f32.mrb[0].mxu0
    %v1288 = vadd.f32 %v1203, %v1287
    %v1289 = vpop.f32.mrb[0].mxu0
    %v1290 = vpop.f32.mrb[0].mxu0
    %v1291 = vpop.f32.mrb[0].mxu0
    %1292 = vdwg.mxu0
    %1293 = vst [vmem:[%s12] sm:$0xff] %v1288
    // Predicated region
    $region66: #{decoder_forward.1} parent=1 // pred_check
      _
    $region67: #{decoder_forward.1} parent=1 // pred_check_branch
      %1295 = sbr.rel (0) target = $region69
    $region68: #{decoder_forward.1} parent=1 // pred_region
      _
    $region69: #{decoder_forward.1} parent=1 // pred_fallthru
      _
    // Predicated region
    $region70: #{decoder_forward.1} parent=1 // pred_check
      _
    $region71: #{decoder_forward.1} parent=1 // pred_check_branch
      %1297 = sbr.rel (0) target = $region73
    $region72: #{decoder_forward.1} parent=1 // pred_region
      _
    $region73: #{decoder_forward.1} parent=1 // pred_fallthru
      _
    // Predicated region
    $region74: #{decoder_forward.1} parent=1 // pred_check
      _
    $region75: #{decoder_forward.1} parent=1 // pred_check_branch
      %1299 = sbr.rel (0) target = $region77
    $region76: #{decoder_forward.1} parent=1 // pred_region
      _
    $region77: #{decoder_forward.1} parent=1 // pred_fallthru
      _
    // Predicated region
    $region78: #{decoder_forward.1} parent=1 // pred_check
      _
    $region79: #{decoder_forward.1} parent=1 // pred_check_branch
      %1301 = sbr.rel (0) target = $region81
    $region80: #{decoder_forward.1} parent=1 // pred_region
      _
    $region81: #{decoder_forward.1} parent=1 // pred_fallthru
      _
    // Predicated region
    $region82: #{decoder_forward.1} parent=1 // pred_check
      _
    $region83: #{decoder_forward.1} parent=1 // pred_check_branch
      %1303 = sbr.rel (0) target = $region85
    $region84: #{decoder_forward.1} parent=1 // pred_region
      _
    $region85: #{decoder_forward.1} parent=1 // pred_fallthru
      _
    // Predicated region
    $region86: #{decoder_forward.1} parent=1 // pred_check
      _
    $region87: #{decoder_forward.1} parent=1 // pred_check_branch
      %1305 = sbr.rel (0) target = $region89
    $region88: #{decoder_forward.1} parent=1 // pred_region
      _
    $region89: #{decoder_forward.1} parent=1 // pred_fallthru
      _
    %1306 = vsyncpa [#allocation4], 1
    %1307 = vsyncpa [#allocation8], 1
    %1308 = vsyncpa [#allocation5], 1

</llo_original>
